<compile_context>
chip_gen: v7x
topology: tpu7x:2x2x1
jax: 0.10.0
libtpu: 0.0.40
codegen_flags: <defaults>
</compile_context>

<pallas_src>
import functools
import math

import jax
import jax.numpy as jnp
from jax import lax
from jax.experimental import pallas as pl
from jax.experimental.pallas import tpu as pltpu


_NEG_BIG = -1e30  # finite "minus infinity" for the running max / masked scores


# ---------------------------------------------------------------------------
# Kernel A: fused QKV projection -> head-major (B, H, T, Dh) q / k / v.
# ---------------------------------------------------------------------------
def _qkv_proj_kernel(x_ref, w_ref, q_ref, k_ref, v_ref, *, n_heads, head_dim):
    x = x_ref[0].astype(w_ref.dtype)                       # (tt, C)
    for idx, out_ref in enumerate((q_ref, k_ref, v_ref)):  # 3 chunked matmuls
        y = jnp.dot(x, w_ref[idx], preferred_element_type=jnp.float32)
        y = y.astype(out_ref.dtype)                        # downcast once
        for h in range(n_heads):                           # static loop
            out_ref[0, h] = y[:, h * head_dim:(h + 1) * head_dim]


# ---------------------------------------------------------------------------
# Kernel B: flash attention (online softmax) + fused output projection + bias.
# ---------------------------------------------------------------------------
def _flash_attn_kernel(q_ref, k_ref, v_ref, wo_ref, bo_ref, o_ref,
                       m_sc, l_sc, acc_sc, att_sc,
                       *, n_heads, head_dim, causal, local, window,
                       compute_dtype):
    qi = pl.program_id(1)
    ki = pl.program_id(2)
    n_kv = pl.num_programs(2)
    tq = q_ref.shape[2]
    tk = k_ref.shape[2]

    @pl.when(ki == 0)
    def _():
        m_sc[...] = jnp.full_like(m_sc, _NEG_BIG)
        l_sc[...] = jnp.zeros_like(l_sc)
        acc_sc[...] = jnp.zeros_like(acc_sc)

    row_start = qi * tq
    col_start = ki * tk

    def attend():
        if local or causal:
            rows = row_start + lax.broadcasted_iota(jnp.int32, (tq, tk), 0)
            cols = col_start + lax.broadcasted_iota(jnp.int32, (tq, tk), 1)
            if local:
                # Local attention only masks the far past (the PyTorch module
                # uses is_causal=False on this branch).
                keep = cols >= rows - (window - 1)
            else:
                keep = cols <= rows                        # causal
        else:
            keep = None

        for h in range(n_heads):                           # static head loop
            q = q_ref[0, h]                                # (tq, Dh), pre-scaled
            k = k_ref[0, h]                                # (tk, Dh)
            v = v_ref[0, h]                                # (tk, Dh)
            # q @ k^T with the contraction over the trailing dims (no k.T).
            s = lax.dot_general(q, k, (((1,), (1,)), ((), ())),
                                preferred_element_type=jnp.float32)  # (tq, tk)
            if keep is not None:
                s = jnp.where(keep, s, _NEG_BIG)
            m_prev = m_sc[h]
            m_new = jnp.maximum(m_prev, jnp.max(s, axis=-1, keepdims=True))
            alpha = jnp.exp(m_prev - m_new)
            p = jnp.exp(s - m_new)
            if keep is not None:
                # Explicitly zero masked probabilities so correctness never
                # depends on exp underflow (fully-masked boundary rows).
                p = jnp.where(keep, p, 0.0)
            l_sc[h] = alpha * l_sc[h] + jnp.sum(p, axis=-1, keepdims=True)
            acc_sc[h] = alpha * acc_sc[h] + jnp.dot(
                p.astype(compute_dtype), v, preferred_element_type=jnp.float32)
            m_sc[h] = m_new

    # Skip compute for fully-masked KV tiles (their DMA is also suppressed by
    # the clamped K/V index_maps in the wrapper).  Masking above keeps the
    # result correct even if a dead tile were computed.
    if local:
        pl.when(col_start + tk - 1 >= row_start - (window - 1))(attend)
    elif causal:
        pl.when(col_start <= row_start + tq - 1)(attend)
    else:
        attend()

    # Last KV tile: normalize each head into its lane slice of the (tq, C)
    # staging scratch, then one K=C output projection against resident W_out.
    @pl.when(ki == n_kv - 1)
    def _():
        for h in range(n_heads):
            inv_l = pl.reciprocal(l_sc[h], approx=True)
            att_sc[:, h * head_dim:(h + 1) * head_dim] = (
                acc_sc[h] * inv_l).astype(att_sc.dtype)
        out = jnp.dot(att_sc[...], wo_ref[...],
                      preferred_element_type=jnp.float32)
        o_ref[0] = (out + bo_ref[...]).astype(o_ref.dtype)


# ---------------------------------------------------------------------------
# Wrapper
# ---------------------------------------------------------------------------
def _choose_tile(n, pref):
    """Largest multiple of 8 that divides n and is <= pref (else n itself)."""
    if n <= pref:
        return n
    start = pref - (pref % 8) if pref % 8 else pref
    for cand in range(start, 7, -8):
        if n % cand == 0:
            return cand
    return n


def _maybe_vmem_limit():
    # Review item: set vmem_limit_bytes explicitly (v5e's scoped default is
    # 16 MiB), but never request more than the chip's physical VMEM.
    try:
        cap = int(pltpu.get_tpu_info().vmem_capacity_bytes)
        return min(64 * 1024 * 1024, cap)
    except Exception:  # interpret mode / non-TPU backend / older API
        return None


def prepare_mha_params(w_qkv, w_out, b_out, *, n_heads,
                       compute_dtype=jnp.bfloat16):
    """One-time weight preprocessing (hoisted out of the forward path)."""
    three_c, c = w_qkv.shape
    assert three_c == 3 * c and c % n_heads == 0
    head_dim = c // n_heads
    scale = 1.0 / math.sqrt(head_dim)
    wt = jnp.asarray(w_qkv).T                              # (C, 3C)
    w_q = wt[:, :c] * scale                                # fold 1/sqrt(Dh)
    w_k = wt[:, c:2 * c]
    w_v = wt[:, 2 * c:]
    w_qkv_s = jnp.stack([w_q, w_k, w_v]).astype(compute_dtype)   # (3, C, C)
    w_out_t = jnp.asarray(w_out).T.astype(compute_dtype)         # (C, C)
    b_out_2d = jnp.asarray(b_out).reshape(1, c).astype(jnp.float32)
    return dict(w_qkv_s=w_qkv_s, w_out_t=w_out_t, b_out=b_out_2d,
                n_heads=n_heads, head_dim=head_dim, compute_dtype=compute_dtype)


def multi_head_attention(x, params, *, causal, local_attention,
                         attention_window, q_tile=256, kv_tile=256,
                         proj_tile=256):
    """Forward of the PyTorch MultiHeadAttention module (eval mode, dropout=0).

    x: (B, T, C).  params: output of prepare_mha_params().
    """
    B, T, C = x.shape
    n_heads = params["n_heads"]
    head_dim = params["head_dim"]
    compute_dtype = params["compute_dtype"]
    assert C == n_heads * head_dim

    local = bool(local_attention and attention_window is not None)
    causal_eff = bool(causal) and not local
    window = int(attention_window) if local else 0

    tt = _choose_tile(T, proj_tile)
    tq = _choose_tile(T, q_tile)
    tk = _choose_tile(T, kv_tile)
    n_kv = T // tk
    vmem_limit = _maybe_vmem_limit()

    # ---- Kernel A: QKV projection -> head-major (B, H, T, Dh). ----
    qkv_shape = jax.ShapeDtypeStruct((B, n_heads, T, head_dim), compute_dtype)
    qkv_out_spec = pl.BlockSpec((1, n_heads, tt, head_dim),
                                lambda b, ti: (b, 0, ti, 0))
    q, k, v = pl.pallas_call(
        functools.partial(_qkv_proj_kernel, n_heads=n_heads, head_dim=head_dim),
        out_shape=[qkv_shape, qkv_shape, qkv_shape],
        grid_spec=pltpu.PrefetchScalarGridSpec(
            num_scalar_prefetch=0,
            grid=(B, T // tt),
            in_specs=[
                pl.BlockSpec((1, tt, C), lambda b, ti: (b, ti, 0)),   # x tile
                pl.BlockSpec((3, C, C), lambda b, ti: (0, 0, 0)),     # weights
            ],
            out_specs=[qkv_out_spec, qkv_out_spec, qkv_out_spec],
        ),
        compiler_params=pltpu.CompilerParams(
            dimension_semantics=("parallel", "parallel"),
            vmem_limit_bytes=vmem_limit),
    )(x, params["w_qkv_s"])

    # ---- Kernel B: flash attention + fused output projection. ----
    # Clamp dead KV tiles onto an already-resident block index so the pipeline
    # does not DMA tiles whose compute is skipped by pl.when.
    if local:
        def kv_index(b, qi, ki):
            first = jnp.maximum((qi * tq - (window - 1)) // tk, 0)
            return (b, 0, jnp.maximum(ki, first), 0)
    elif causal_eff:
        def kv_index(b, qi, ki):
            last = (qi * tq + tq - 1) // tk
            return (b, 0, jnp.minimum(ki, last), 0)
    else:
        def kv_index(b, qi, ki):
            return (b, 0, ki, 0)

    out = pl.pallas_call(
        functools.partial(_flash_attn_kernel, n_heads=n_heads,
                          head_dim=head_dim, causal=causal_eff, local=local,
                          window=window, compute_dtype=compute_dtype),
        out_shape=jax.ShapeDtypeStruct((B, T, C), x.dtype),
        grid_spec=pltpu.PrefetchScalarGridSpec(
            num_scalar_prefetch=0,
            grid=(B, T // tq, n_kv),
            in_specs=[
                pl.BlockSpec((1, n_heads, tq, head_dim),
                             lambda b, qi, ki: (b, 0, qi, 0)),        # Q tile
                pl.BlockSpec((1, n_heads, tk, head_dim), kv_index),   # K tile
                pl.BlockSpec((1, n_heads, tk, head_dim), kv_index),   # V tile
                pl.BlockSpec((C, C), lambda b, qi, ki: (0, 0)),       # W_out^T
                pl.BlockSpec((1, C), lambda b, qi, ki: (0, 0)),       # bias
            ],
            out_specs=pl.BlockSpec((1, tq, C), lambda b, qi, ki: (b, qi, 0)),
            scratch_shapes=[
                pltpu.VMEM((n_heads, tq, 1), jnp.float32),            # m
                pltpu.VMEM((n_heads, tq, 1), jnp.float32),            # l
                pltpu.VMEM((n_heads, tq, head_dim), jnp.float32),     # acc
                pltpu.VMEM((tq, C), compute_dtype),                   # att stage
            ]),
        compiler_params=pltpu.CompilerParams(
            dimension_semantics=("parallel", "parallel", "arbitrary"),
            vmem_limit_bytes=vmem_limit),
    )(q, k, v, params["w_out_t"], params["b_out"])
    return out


# ---------------------------------------------------------------------------
# Pure-JAX reference (mirrors the PyTorch module's forward, dropout=0).
# ---------------------------------------------------------------------------
def reference_mha(x, w_qkv, w_out, b_out, n_heads, *, causal,
                  local_attention, attention_window):
    B, T, C = x.shape
    Dh = C // n_heads
    hp = jax.lax.Precision.HIGHEST
    qkv = jnp.dot(x, w_qkv.T, precision=hp)
    qkv = qkv.reshape(B, T, 3, n_heads, Dh).transpose(2, 0, 3, 1, 4)
    q, k, v = qkv[0], qkv[1], qkv[2]                       # (B, H, T, Dh)
    i = jnp.arange(T)[:, None]
    j = jnp.arange(T)[None, :]
    if local_attention and attention_window is not None:
        mask = jnp.where(j < i - attention_window + 1, -jnp.inf, 0.0)
    elif causal:
        mask = jnp.where(j > i, -jnp.inf, 0.0)
    else:
        mask = jnp.zeros((T, T), jnp.float32)
    s = jnp.einsum('bhtd,bhsd->bhts', q, k, precision=hp) / math.sqrt(Dh) + mask
    p = jax.nn.softmax(s, axis=-1)
    o = jnp.einsum('bhts,bhsd->bhtd', p, v, precision=hp)
    o = o.transpose(0, 2, 1, 3).reshape(B, T, C)
    return jnp.dot(o, w_out.T, precision=hp) + b_out


if __name__ == "__main__":
    # Small but lane-dense shapes: head_dim = 128, C a multiple of 128, and
    # the grid exercises multiple q-tiles / kv-tiles / heads and the dead-tile
    # skip + clamp paths.
    B, T, d_model, n_heads = 2, 512, 256, 2
    attention_window = 64

    key = jax.random.PRNGKey(0)
    kx, kqkv, kw, kb = jax.random.split(key, 4)
    x = jax.random.normal(kx, (B, T, d_model), jnp.float32)
    w_qkv = jax.random.normal(kqkv, (3 * d_model, d_model), jnp.float32) * 0.05
    w_out = jax.random.normal(kw, (d_model, d_model), jnp.float32) * 0.05
    b_out = jax.random.normal(kb, (d_model,), jnp.float32) * 0.05

    params_f32 = prepare_mha_params(w_qkv, w_out, b_out, n_heads=n_heads,
                                    compute_dtype=jnp.float32)
    params_bf16 = prepare_mha_params(w_qkv, w_out, b_out, n_heads=n_heads,
                                     compute_dtype=jnp.bfloat16)

    configs = [
        dict(causal=True, local_attention=True, attention_window=attention_window),
        dict(causal=True, local_attention=False, attention_window=None),
        dict(causal=False, local_attention=False, attention_window=None),
    ]

    # f32 compute path against a high-precision reference.
    for cfg in configs:
        ref = reference_mha(x, w_qkv, w_out, b_out, n_heads, **cfg)
        out = multi_head_attention(x, params_f32, **cfg)
        out = jax.block_until_ready(out)
        assert out.shape == ref.shape
        assert bool(jnp.all(jnp.isfinite(out))), f"non-finite output for {cfg}"
        assert jnp.allclose(out, ref, atol=1e-2, rtol=1e-2), (
            f"f32 mismatch for {cfg}: max abs err "
            f"{float(jnp.max(jnp.abs(out - ref)))}")

    # Exercise the dead-KV-tile clamp / skip over 4 KV tiles (causal).
    cfg = configs[1]
    ref = reference_mha(x, w_qkv, w_out, b_out, n_heads, **cfg)
    out = multi_head_attention(x, params_f32, kv_tile=128, **cfg)
    out = jax.block_until_ready(out)
    assert jnp.allclose(out, ref, atol=1e-2, rtol=1e-2), (
        f"f32/kv128 mismatch: max abs err "
        f"{float(jnp.max(jnp.abs(out - ref)))}")

    # bf16 MXU path (review item): loose tolerance vs. the f32 reference.
    out = multi_head_attention(x, params_bf16, **cfg)
    out = jax.block_until_ready(out)
    assert bool(jnp.all(jnp.isfinite(out)))
    assert jnp.allclose(out, ref, atol=5e-2, rtol=5e-2), (
        f"bf16 mismatch: max abs err {float(jnp.max(jnp.abs(out - ref)))}")

    print("KERNEL_OK")
</pallas_src>

<mosaic_0001>
module attributes {stable_mosaic.version = 11 : i64} {
  func.func @_qkv_proj_kernel(%arg0: i32, %arg1: i32, %arg2: memref<1x256x256xf32, #tpu.memory_space<vmem>>, %arg3: memref<3x256x256xf32, #tpu.memory_space<vmem>>, %arg4: memref<1x2x256x128xf32, #tpu.memory_space<vmem>>, %arg5: memref<1x2x256x128xf32, #tpu.memory_space<vmem>>, %arg6: memref<1x2x256x128xf32, #tpu.memory_space<vmem>>) attributes {dimension_semantics = [#tpu.dimension_semantics<parallel>, #tpu.dimension_semantics<parallel>], iteration_bounds = array<i64: 2, 2>, scalar_prefetch = 0 : i64, scratch_operands = 0 : i64, tpu.core_type = #tpu.core_type<tc>, window_params = [{transform_indices = @transform_0, window_bounds = array<i64: 1, 256, 256>}, {pipeline_mode = #tpu.pipeline_mode<synchronous>, transform_indices = @transform_1, window_bounds = array<i64: 3, 256, 256>}, {transform_indices = @transform_2, window_bounds = array<i64: 1, 2, 256, 128>}, {transform_indices = @transform_3, window_bounds = array<i64: 1, 2, 256, 128>}, {transform_indices = @transform_4, window_bounds = array<i64: 1, 2, 256, 128>}]} {
    %c0 = arith.constant 0 : index
    %c0_0 = arith.constant 0 : index
    %c0_1 = arith.constant 0 : index
    %0 = vector.load %arg2[%c0, %c0_0, %c0_1] : memref<1x256x256xf32, #tpu.memory_space<vmem>>, vector<1x256x256xf32>
    %1 = vector.shape_cast %0 : vector<1x256x256xf32> to vector<256x256xf32>
    %c0_2 = arith.constant 0 : index
    %c0_3 = arith.constant 0 : index
    %c0_4 = arith.constant 0 : index
    %2 = vector.load %arg3[%c0_2, %c0_3, %c0_4] : memref<3x256x256xf32, #tpu.memory_space<vmem>>, vector<1x256x256xf32>
    %3 = vector.shape_cast %2 : vector<1x256x256xf32> to vector<256x256xf32>
    %cst = arith.constant dense<0.000000e+00> : vector<256x256xf32>
    %4 = tpu.matmul %1, %3, %cst {dimension_numbers = #tpu.dot_dimension_numbers<[1], [0], [0], [1], [0, 0, 1, 1], [], []>} : vector<256x256xf32>, vector<256x256xf32>, vector<256x256xf32> -> vector<256x256xf32>
    %5 = vector.extract_strided_slice %4 {offsets = [0, 0], sizes = [256, 128], strides = [1, 1]} : vector<256x256xf32> to vector<256x128xf32>
    %c0_5 = arith.constant 0 : index
    %c0_6 = arith.constant 0 : index
    %c0_7 = arith.constant 0 : index
    %c0_8 = arith.constant 0 : index
    %6 = vector.load %arg4[%c0_5, %c0_6, %c0_7, %c0_8] : memref<1x2x256x128xf32, #tpu.memory_space<vmem>>, vector<1x1x256x128xf32>
    %7 = vector.shape_cast %6 : vector<1x1x256x128xf32> to vector<256x128xf32>
    %8 = vector.shape_cast %5 : vector<256x128xf32> to vector<1x1x256x128xf32>
    tpu.vector_store %arg4[%c0_5, %c0_6, %c0_7, %c0_8], %8 {strides = array<i32>} : memref<1x2x256x128xf32, #tpu.memory_space<vmem>>, vector<1x1x256x128xf32>,
    %9 = vector.extract_strided_slice %4 {offsets = [0, 128], sizes = [256, 128], strides = [1, 1]} : vector<256x256xf32> to vector<256x128xf32>
    %c0_9 = arith.constant 0 : index
    %c1 = arith.constant 1 : index
    %c0_10 = arith.constant 0 : index
    %c0_11 = arith.constant 0 : index
    %10 = vector.load %arg4[%c0_9, %c1, %c0_10, %c0_11] : memref<1x2x256x128xf32, #tpu.memory_space<vmem>>, vector<1x1x256x128xf32>
    %11 = vector.shape_cast %10 : vector<1x1x256x128xf32> to vector<256x128xf32>
    %12 = vector.shape_cast %9 : vector<256x128xf32> to vector<1x1x256x128xf32>
    tpu.vector_store %arg4[%c0_9, %c1, %c0_10, %c0_11], %12 {strides = array<i32>} : memref<1x2x256x128xf32, #tpu.memory_space<vmem>>, vector<1x1x256x128xf32>,
    %c1_12 = arith.constant 1 : index
    %c0_13 = arith.constant 0 : index
    %c0_14 = arith.constant 0 : index
    %13 = vector.load %arg3[%c1_12, %c0_13, %c0_14] : memref<3x256x256xf32, #tpu.memory_space<vmem>>, vector<1x256x256xf32>
    %14 = vector.shape_cast %13 : vector<1x256x256xf32> to vector<256x256xf32>
    %cst_15 = arith.constant dense<0.000000e+00> : vector<256x256xf32>
    %15 = tpu.matmul %1, %14, %cst_15 {dimension_numbers = #tpu.dot_dimension_numbers<[1], [0], [0], [1], [0, 0, 1, 1], [], []>} : vector<256x256xf32>, vector<256x256xf32>, vector<256x256xf32> -> vector<256x256xf32>
    %16 = vector.extract_strided_slice %15 {offsets = [0, 0], sizes = [256, 128], strides = [1, 1]} : vector<256x256xf32> to vector<256x128xf32>
    %c0_16 = arith.constant 0 : index
    %c0_17 = arith.constant 0 : index
    %c0_18 = arith.constant 0 : index
    %c0_19 = arith.constant 0 : index
    %17 = vector.load %arg5[%c0_16, %c0_17, %c0_18, %c0_19] : memref<1x2x256x128xf32, #tpu.memory_space<vmem>>, vector<1x1x256x128xf32>
    %18 = vector.shape_cast %17 : vector<1x1x256x128xf32> to vector<256x128xf32>
    %19 = vector.shape_cast %16 : vector<256x128xf32> to vector<1x1x256x128xf32>
    tpu.vector_store %arg5[%c0_16, %c0_17, %c0_18, %c0_19], %19 {strides = array<i32>} : memref<1x2x256x128xf32, #tpu.memory_space<vmem>>, vector<1x1x256x128xf32>,
    %20 = vector.extract_strided_slice %15 {offsets = [0, 128], sizes = [256, 128], strides = [1, 1]} : vector<256x256xf32> to vector<256x128xf32>
    %c0_20 = arith.constant 0 : index
    %c1_21 = arith.constant 1 : index
    %c0_22 = arith.constant 0 : index
    %c0_23 = arith.constant 0 : index
    %21 = vector.load %arg5[%c0_20, %c1_21, %c0_22, %c0_23] : memref<1x2x256x128xf32, #tpu.memory_space<vmem>>, vector<1x1x256x128xf32>
    %22 = vector.shape_cast %21 : vector<1x1x256x128xf32> to vector<256x128xf32>
    %23 = vector.shape_cast %20 : vector<256x128xf32> to vector<1x1x256x128xf32>
    tpu.vector_store %arg5[%c0_20, %c1_21, %c0_22, %c0_23], %23 {strides = array<i32>} : memref<1x2x256x128xf32, #tpu.memory_space<vmem>>, vector<1x1x256x128xf32>,
    %c2 = arith.constant 2 : index
    %c0_24 = arith.constant 0 : index
    %c0_25 = arith.constant 0 : index
    %24 = vector.load %arg3[%c2, %c0_24, %c0_25] : memref<3x256x256xf32, #tpu.memory_space<vmem>>, vector<1x256x256xf32>
    %25 = vector.shape_cast %24 : vector<1x256x256xf32> to vector<256x256xf32>
    %cst_26 = arith.constant dense<0.000000e+00> : vector<256x256xf32>
    %26 = tpu.matmul %1, %25, %cst_26 {dimension_numbers = #tpu.dot_dimension_numbers<[1], [0], [0], [1], [0, 0, 1, 1], [], []>} : vector<256x256xf32>, vector<256x256xf32>, vector<256x256xf32> -> vector<256x256xf32>
    %27 = vector.extract_strided_slice %26 {offsets = [0, 0], sizes = [256, 128], strides = [1, 1]} : vector<256x256xf32> to vector<256x128xf32>
    %c0_27 = arith.constant 0 : index
    %c0_28 = arith.constant 0 : index
    %c0_29 = arith.constant 0 : index
    %c0_30 = arith.constant 0 : index
    %28 = vector.load %arg6[%c0_27, %c0_28, %c0_29, %c0_30] : memref<1x2x256x128xf32, #tpu.memory_space<vmem>>, vector<1x1x256x128xf32>
    %29 = vector.shape_cast %28 : vector<1x1x256x128xf32> to vector<256x128xf32>
    %30 = vector.shape_cast %27 : vector<256x128xf32> to vector<1x1x256x128xf32>
    tpu.vector_store %arg6[%c0_27, %c0_28, %c0_29, %c0_30], %30 {strides = array<i32>} : memref<1x2x256x128xf32, #tpu.memory_space<vmem>>, vector<1x1x256x128xf32>,
    %31 = vector.extract_strided_slice %26 {offsets = [0, 128], sizes = [256, 128], strides = [1, 1]} : vector<256x256xf32> to vector<256x128xf32>
    %c0_31 = arith.constant 0 : index
    %c1_32 = arith.constant 1 : index
    %c0_33 = arith.constant 0 : index
    %c0_34 = arith.constant 0 : index
    %32 = vector.load %arg6[%c0_31, %c1_32, %c0_33, %c0_34] : memref<1x2x256x128xf32, #tpu.memory_space<vmem>>, vector<1x1x256x128xf32>
    %33 = vector.shape_cast %32 : vector<1x1x256x128xf32> to vector<256x128xf32>
    %34 = vector.shape_cast %31 : vector<256x128xf32> to vector<1x1x256x128xf32>
    tpu.vector_store %arg6[%c0_31, %c1_32, %c0_33, %c0_34], %34 {strides = array<i32>} : memref<1x2x256x128xf32, #tpu.memory_space<vmem>>, vector<1x1x256x128xf32>,
    return
  }
  func.func @transform_0(%arg0: i32, %arg1: i32) -> (i32, i32, i32) {
    %c0_i32 = arith.constant 0 : i32
    %c0_i32_0 = arith.constant 0 : i32
    return %arg0, %arg1, %c0_i32 : i32, i32, i32
  }
  func.func @transform_1(%arg0: i32, %arg1: i32) -> (i32, i32, i32) {
    %c0_i32 = arith.constant 0 : i32
    %c0_i32_0 = arith.constant 0 : i32
    %c0_i32_1 = arith.constant 0 : i32
    %c0_i32_2 = arith.constant 0 : i32
    return %c0_i32, %c0_i32_0, %c0_i32_1 : i32, i32, i32
  }
  func.func @transform_2(%arg0: i32, %arg1: i32) -> (i32, i32, i32, i32) {
    %c0_i32 = arith.constant 0 : i32
    %c0_i32_0 = arith.constant 0 : i32
    %c0_i32_1 = arith.constant 0 : i32
    return %arg0, %c0_i32, %arg1, %c0_i32_0 : i32, i32, i32, i32
  }
  func.func @transform_3(%arg0: i32, %arg1: i32) -> (i32, i32, i32, i32) {
    %c0_i32 = arith.constant 0 : i32
    %c0_i32_0 = arith.constant 0 : i32
    %c0_i32_1 = arith.constant 0 : i32
    return %arg0, %c0_i32, %arg1, %c0_i32_0 : i32, i32, i32, i32
  }
  func.func @transform_4(%arg0: i32, %arg1: i32) -> (i32, i32, i32, i32) {
    %c0_i32 = arith.constant 0 : i32
    %c0_i32_0 = arith.constant 0 : i32
    %c0_i32_1 = arith.constant 0 : i32
    return %arg0, %c0_i32, %arg1, %c0_i32_0 : i32, i32, i32, i32
  }
}

</mosaic_0001>

<llo_original>
// kernel: tpu_custom_call.1
$region0: #{tpu_custom_call.1}
  #allocation0 [shape = 'u32[]', space=smem, size = 0x4, offset = 0x4, fixed_abs, tag = 'smem constant byte address 0x4 - core index']
  #allocation1 [shape = 'u32[144,128]{1,0:T(1,128)}', space=vmem, size = 0x12000, scoped, tag = 'internal scratch']
  #allocation11 [shape = 's32[]', space=sflag, size = 0x4, offset = 0, fixed_abs, tag = 'sflag constant byte address 0x0 - dummy sync flag']
  #allocation13 [shape = 's32[]', space=sflag, size = 0x4, offset = 0, fixed_abs, tag = 'sflag constant byte address 0x0 - dummy sync flag']
  #allocation15 [shape = 's32[]', space=sflag, size = 0x4, offset = 0, fixed_abs, tag = 'sflag constant byte address 0x0 - dummy sync flag']
  %s0 = inlined_call_operand.hbm [shape: f32[2,512,256], index: 0, kind: input, shape index: {}]
  %s1 = inlined_call_operand.hbm [shape: f32[3,256,256], index: 1, kind: input, shape index: {}]
  %s2 = inlined_call_operand.hbm [shape: f32[2,2,512,128], index: 2, kind: output, shape index: {0}]
  %s3 = inlined_call_operand.hbm [shape: f32[2,2,512,128], index: 3, kind: output, shape index: {1}]
  %s4 = inlined_call_operand.hbm [shape: f32[2,2,512,128], index: 4, kind: output, shape index: {2}]
  %5 = xla_tuple %s2, %s3, %s4
  %s6 = sld [smem:[#allocation0]]
  $region65: #{tpu_custom_call.1} parent=0
    _
  %s8 = ssub.s32 1, %s6
  %s9 = scalar_select 0, %s8, %s6
  $region1: #{tpu_custom_call.1} parent=0
    #allocation2 [shape = 'u8[524288]{0}', space=vmem, size = 0x80000, scoped, tag = 'input window, operand 0']
    #allocation3 [shape = 's32[2]{0}', space=sflag, size = 0x8, scoped, tag = 'scoped memory for tpu_custom_call.1']
    #allocation4 [shape = 's32[2]{0}', space=sflag, size = 0x8, scoped, tag = 'scoped memory for tpu_custom_call.1']
    #allocation5 [shape = 'u8[786432]{0}', space=vmem, size = 0xc0000, scoped, tag = 'input window, operand 1, single buffered']
    #allocation6 [shape = 's32[1]{0}', space=sflag, size = 0x4, scoped, tag = 'scoped memory for tpu_custom_call.1']
    #allocation7 [shape = 'u8[524288]{0}', space=vmem, size = 0x80000, scoped, tag = 'output window, operand 0']
    #allocation8 [shape = 'u8[524288]{0}', space=vmem, size = 0x80000, scoped, tag = 'output window, operand 1']
    #allocation9 [shape = 's32[2]{0}', space=sflag, size = 0x8, scoped, tag = 'scoped memory for tpu_custom_call.1']
    #allocation10 [shape = 'u8[524288]{0}', space=vmem, size = 0x80000, scoped, tag = 'output window, operand 2']
    %10 = vsyncpa [#allocation3], 0
    %s11 = scalar_lea.sflag [#allocation3], 1
    %12 = vsyncpa %s11, 0
    %13 = vsyncpa [#allocation6], 0
    %14 = vsyncpa [#allocation4], 0
    %s15 = scalar_lea.sflag [#allocation4], 1
    %16 = vsyncpa %s15, 0
    %17 = vsyncpa [#allocation9], 0
    %s18 = scalar_lea.sflag [#allocation9], 1
    %19 = vsyncpa %s18, 0
    loop: start=0, step=1, limit=6
    $region2: #{tpu_custom_call.1} parent=1 // loop_pre_header
      _
    $region3: #{tpu_custom_call.1} parent=1 // loop_header
      %s21 = sphi 0, %s25
      %p22 = scmp.ge.s32.totalorder %s21, 6
      %s28 = sphi 0, %s40
      %s29 = sphi 0, %s36
      %s30 = sphi 0, %s28
      %s31 = sphi 0, %s29
      %s32 = sphi 0, %s30
      %s33 = sphi 0, %s31
      %s45 = sphi 0, %s47
      %s48 = sphi 0, %s45
      %s49 = sphi 0, %s48
      %s65 = sphi 0, %s49
      %s69 = sphi 0, %s69
      %s71 = sphi 0, %s69
      %s72 = sphi 0, %s71
      %s86 = sphi 0, %s72
      %s94 = sphi 0, %s96
      %s97 = sphi 0, %s94
      %s98 = sphi 0, %s97
      %s114 = sphi 0, %s98
      %s122 = sphi 0, %s124
      %s125 = sphi 0, %s122
      %s126 = sphi 0, %s125
      %s142 = sphi 0, %s126
      %s150 = sphi 0, %s152
      %s153 = sphi 0, %s150
      %s154 = sphi 0, %s153
      %s170 = sphi 0, %s154
    $region4: #{tpu_custom_call.1} parent=1 // loop_header_branch
      %24 = sbr.rel (%p22) target = $region8
    $region5: #{tpu_custom_call.1} parent=1 // loop_body
      %s26 = ssub.s32 %s21, 1
      %s27 = ssub.s32 %s21, 2
      %s34 = sadd.s32 1, %s29
      %p35 = scmp.ge.s32.totalorder %s34, 2
      %s36 = scalar_select %p35, 0, %s34
      %s37 = sadd.s32 1, %s28
      %s38 = scalar_select %p35, %s37, %s28
      %p39 = scmp.ge.s32.totalorder %s38, 2
      %s40 = scalar_select %p39, 0, %s38
      %s41 = ssub.s32 %s28, %s40
      %s42 = ssub.s32 %s29, %s36
      %s43 = sor.u32 %s41, %s42
      %p44 = scmp.eq.s32.totalorder %s43, 0
      %s46 = sadd.s32 %s45, 1
      %s47 = scalar_select %p44, %s45, %s46
      %p50 = pneg %p44
      %p51 = scmp.eq.s32.totalorder %s21, 3
      %p52 = por %p50, %p51
      %p53 = scmp.ne.s32.totalorder %s45, %s48
      %p54 = scmp.eq.s32.totalorder %s21, 0
      %p55 = por %p53, %p54
      %p56 = scmp.ne.s32.totalorder %s45, %s48
      %p57 = scmp.eq.s32.totalorder %s26, 3
      %p58 = por %p56, %p57
      %p59 = scmp.ne.s32.totalorder %s48, %s49
      %p60 = scmp.eq.s32.totalorder %s26, 0
      %p61 = por %p59, %p60
      %p62 = scmp.ne.s32.totalorder %s48, %s49
      %p63 = scmp.eq.s32.totalorder %s27, 3
      %p64 = por %p62, %p63
      %p66 = scmp.ne.s32.totalorder %s49, %s65
      %p67 = scmp.eq.s32.totalorder %s27, 0
      %p68 = por %p66, %p67
      %s70 = sadd.s32 %s69, 1
      %p73 = scmp.eq.s32.totalorder %s21, 3
      %p74 = scmp.ne.s32.totalorder %s69, %s71
      %p75 = scmp.eq.s32.totalorder %s21, 0
      %p76 = por %p74, %p75
      %p77 = scmp.ne.s32.totalorder %s69, %s71
      %p78 = scmp.eq.s32.totalorder %s26, 3
      %p79 = por %p77, %p78
      %p80 = scmp.ne.s32.totalorder %s71, %s72
      %p81 = scmp.eq.s32.totalorder %s26, 0
      %p82 = por %p80, %p81
      %p83 = scmp.ne.s32.totalorder %s71, %s72
      %p84 = scmp.eq.s32.totalorder %s27, 3
      %p85 = por %p83, %p84
      %p87 = scmp.ne.s32.totalorder %s72, %s86
      %p88 = scmp.eq.s32.totalorder %s27, 0
      %p89 = por %p87, %p88
      %s90 = ssub.s32 %s28, %s40
      %s91 = ssub.s32 %s29, %s36
      %s92 = sor.u32 %s90, %s91
      %p93 = scmp.eq.s32.totalorder %s92, 0
      %s95 = sadd.s32 %s94, 1
      %s96 = scalar_select %p93, %s94, %s95
      %p99 = pneg %p93
      %p100 = scmp.eq.s32.totalorder %s21, 3
      %p101 = por %p99, %p100
      %p102 = scmp.ne.s32.totalorder %s94, %s97
      %p103 = scmp.eq.s32.totalorder %s21, 0
      %p104 = por %p102, %p103
      %p105 = scmp.ne.s32.totalorder %s94, %s97
      %p106 = scmp.eq.s32.totalorder %s26, 3
      %p107 = por %p105, %p106
      %p108 = scmp.ne.s32.totalorder %s97, %s98
      %p109 = scmp.eq.s32.totalorder %s26, 0
      %p110 = por %p108, %p109
      %p111 = scmp.ne.s32.totalorder %s97, %s98
      %p112 = scmp.eq.s32.totalorder %s27, 3
      %p113 = por %p111, %p112
      %p115 = scmp.ne.s32.totalorder %s98, %s114
      %p116 = scmp.eq.s32.totalorder %s27, 0
      %p117 = por %p115, %p116
      %s118 = ssub.s32 %s28, %s40
      %s119 = ssub.s32 %s29, %s36
      %s120 = sor.u32 %s118, %s119
      %p121 = scmp.eq.s32.totalorder %s120, 0
      %s123 = sadd.s32 %s122, 1
      %s124 = scalar_select %p121, %s122, %s123
      %p127 = pneg %p121
      %p128 = scmp.eq.s32.totalorder %s21, 3
      %p129 = por %p127, %p128
      %p130 = scmp.ne.s32.totalorder %s122, %s125
      %p131 = scmp.eq.s32.totalorder %s21, 0
      %p132 = por %p130, %p131
      %p133 = scmp.ne.s32.totalorder %s122, %s125
      %p134 = scmp.eq.s32.totalorder %s26, 3
      %p135 = por %p133, %p134
      %p136 = scmp.ne.s32.totalorder %s125, %s126
      %p137 = scmp.eq.s32.totalorder %s26, 0
      %p138 = por %p136, %p137
      %p139 = scmp.ne.s32.totalorder %s125, %s126
      %p140 = scmp.eq.s32.totalorder %s27, 3
      %p141 = por %p139, %p140
      %p143 = scmp.ne.s32.totalorder %s126, %s142
      %p144 = scmp.eq.s32.totalorder %s27, 0
      %p145 = por %p143, %p144
      %s146 = ssub.s32 %s28, %s40
      %s147 = ssub.s32 %s29, %s36
      %s148 = sor.u32 %s146, %s147
      %p149 = scmp.eq.s32.totalorder %s148, 0
      %s151 = sadd.s32 %s150, 1
      %s152 = scalar_select %p149, %s150, %s151
      %p155 = pneg %p149
      %p156 = scmp.eq.s32.totalorder %s21, 3
      %p157 = por %p155, %p156
      %p158 = scmp.ne.s32.totalorder %s150, %s153
      %p159 = scmp.eq.s32.totalorder %s21, 0
      %p160 = por %p158, %p159
      %p161 = scmp.ne.s32.totalorder %s150, %s153
      %p162 = scmp.eq.s32.totalorder %s26, 3
      %p163 = por %p161, %p162
      %p164 = scmp.ne.s32.totalorder %s153, %s154
      %p165 = scmp.eq.s32.totalorder %s26, 0
      %p166 = por %p164, %p165
      %p167 = scmp.ne.s32.totalorder %s153, %s154
      %p168 = scmp.eq.s32.totalorder %s27, 3
      %p169 = por %p167, %p168
      %p171 = scmp.ne.s32.totalorder %s154, %s170
      %p172 = scmp.eq.s32.totalorder %s27, 0
      %p173 = por %p171, %p172
      %p174 = scmp.le.s32.totalorder 1, %s21
      %p175 = scmp.lt.s32.totalorder %s21, 5
      %p176 = pnand %p174, %p175
      %p177 = pneg %p176
      // Predicated region
      $region9: #{tpu_custom_call.1} parent=5 // pred_check
        _
      $region10: #{tpu_custom_call.1} parent=5 // pred_check_branch
        %179 = sbr.rel (%p176) target = $region12
      $region11: #{tpu_custom_call.1} parent=5 // pred_region
        %s180 = ssub.s32 %s21, 1
        // Predicated region
        $region13: #{tpu_custom_call.1} parent=11 // pred_check
          %p181 = pneg %p82
        $region14: #{tpu_custom_call.1} parent=11 // pred_check_branch
          %183 = sbr.rel (%p181) target = $region16
        $region15: #{tpu_custom_call.1} parent=11 // pred_region
          %s185 = ssub.s32 24576, 24576
          %186 = vsyncadd [#allocation6], %s185
          %s187 = sshll.u32 [#allocation5], 4
          %s188 = int_to_ptr.vmem [resolvable:$true] %s187
          %193 = dma.hbm_to_vmem [thread:$0]  %s1, 24576, %s188, [#allocation6], 256, 256, 16
        $region16: #{tpu_custom_call.1} parent=11 // pred_fallthru
          _
      $region12: #{tpu_custom_call.1} parent=5 // pred_fallthru
        _
      %p194 = scmp.lt.s32.totalorder %s21, 4
      // Predicated region
      $region17: #{tpu_custom_call.1} parent=5 // pred_check
        %p195 = pneg %p194
      $region18: #{tpu_custom_call.1} parent=5 // pred_check_branch
        %197 = sbr.rel (%p195) target = $region20
      $region19: #{tpu_custom_call.1} parent=5 // pred_region
        // Predicated region
        $region21: #{tpu_custom_call.1} parent=19 // pred_check
          %p198 = pneg %p55
        $region22: #{tpu_custom_call.1} parent=19 // pred_check_branch
          %200 = sbr.rel (%p198) target = $region24
        $region23: #{tpu_custom_call.1} parent=19 // pred_region
          %s201 = sand.u32 %s45, 1
          %s202 = scalar_lea.sflag [#allocation3], %s201
          %s203 = sand.u32 %s45, 1
          %s204 = smul.addr %s203, 512
          %s205 = scalar_lea.vmem [#allocation2], %s204
          %s206 = smul.u32 32, %s29
          %s208 = ssub.s32 8192, 8192
          %209 = vsyncadd %s202, %s208
          %s210 = smul.addr %s206, 2
          %s211 = smul.addr %s28, 128
          %s212 = sadd.s32 %s210, %s211
          %s213 = smul.addr %s212, 128
          %s214 = scalar_lea.hbm %s0, %s213
          %s215 = sshll.u32 %s205, 4
          %s216 = int_to_ptr.vmem [resolvable:$true] %s215
          %221 = dma.hbm_to_vmem [thread:$0]  %s214, 8192, %s216, %s202, 256, 256, 16
        $region24: #{tpu_custom_call.1} parent=19 // pred_fallthru
          _
      $region20: #{tpu_custom_call.1} parent=5 // pred_fallthru
        _
      %p222 = scmp.le.s32.totalorder 1, %s21
      %p223 = scmp.lt.s32.totalorder %s21, 5
      %p224 = pnand %p222, %p223
      %p225 = pneg %p224
      // Predicated region
      $region25: #{tpu_custom_call.1} parent=5 // pred_check
        _
      $region26: #{tpu_custom_call.1} parent=5 // pred_check_branch
        %227 = sbr.rel (%p224) target = $region28
      $region27: #{tpu_custom_call.1} parent=5 // pred_region
        %s228 = ssub.s32 %s21, 1
        %s229 = sand.u32 %s48, 1
        %s230 = scalar_lea.sflag [#allocation3], %s229
        %s231 = sand.u32 %s48, 1
        %s232 = smul.addr %s231, 512
        %s233 = scalar_lea.vmem [#allocation2], %s232
        // Predicated region
        $region29: #{tpu_custom_call.1} parent=27 // pred_check
          %p234 = pneg %p61
        $region30: #{tpu_custom_call.1} parent=27 // pred_check_branch
          %236 = sbr.rel (%p234) target = $region32
        $region31: #{tpu_custom_call.1} parent=27 // pred_region
          %237 = dma.done %s230, 8192
        $region32: #{tpu_custom_call.1} parent=27 // pred_fallthru
          _
        // Predicated region
        $region33: #{tpu_custom_call.1} parent=27 // pred_check
          %p238 = pneg %p82
        $region34: #{tpu_custom_call.1} parent=27 // pred_check_branch
          %240 = sbr.rel (%p238) target = $region36
        $region35: #{tpu_custom_call.1} parent=27 // pred_region
          %241 = dma.done [#allocation6], 24576
        $region36: #{tpu_custom_call.1} parent=27 // pred_fallthru
          _
        %s242 = sand.u32 %s48, 1
        %s243 = scalar_lea.sflag [#allocation3], %s242
        %s244 = sand.u32 %s48, 1
        %s245 = smul.addr %s244, 512
        %s246 = scalar_lea.vmem [#allocation2], %s245
        %p247 = pneg %p61
        %p248 = pneg %p58
        %p249 = pneg %p82
        %p250 = pneg %p79
        %p251 = pneg %p110
        %p252 = pneg %p107
        %s253 = sand.u32 %s97, 1
        %s254 = scalar_lea.sflag [#allocation4], %s253
        %s255 = sand.u32 %s97, 1
        %s256 = smul.addr %s255, 512
        %s257 = scalar_lea.vmem [#allocation7], %s256
        %p258 = pneg %p138
        %p259 = pneg %p135
        %s260 = sand.u32 %s26, 1
        %s261 = scalar_lea.sflag [#allocation9], %s260
        %s262 = sand.u32 %s125, 1
        %s263 = smul.addr %s262, 512
        %s264 = scalar_lea.vmem [#allocation8], %s263
        %p265 = pneg %p166
        %p266 = pneg %p163
        %s267 = sand.u32 %s26, 1
        %s268 = scalar_lea.sflag [#allocation9], %s267
        %s269 = sand.u32 %s153, 1
        %s270 = smul.addr %s269, 512
        %s271 = scalar_lea.vmem [#allocation10], %s270
        %s272 = smul.u32 32, %s31
        %s273 = smul.u32 32, %s31
        %s274 = smul.u32 32, %s31
        %s275 = smul.u32 32, %s31
        %v276 = vld [vmem:[%s233] sm:$0xff]
        %v277 = vld [vmem:[%s233 + $0x8] sm:$0xff]
        %v278 = vld [vmem:[%s233 + $0x10] sm:$0xff]
        %v279 = vld [vmem:[%s233 + $0x18] sm:$0xff]
        %v280 = vld [vmem:[%s233 + $0x20] sm:$0xff]
        %v281 = vld [vmem:[%s233 + $0x28] sm:$0xff]
        %v282 = vld [vmem:[%s233 + $0x30] sm:$0xff]
        %v283 = vld [vmem:[%s233 + $0x38] sm:$0xff]
        %v284 = vld [vmem:[%s233 + $0x40] sm:$0xff]
        %v285 = vld [vmem:[%s233 + $0x48] sm:$0xff]
        %v286 = vld [vmem:[%s233 + $0x50] sm:$0xff]
        %v287 = vld [vmem:[%s233 + $0x58] sm:$0xff]
        %v288 = vld [vmem:[%s233 + $0x60] sm:$0xff]
        %v289 = vld [vmem:[%s233 + $0x68] sm:$0xff]
        %v290 = vld [vmem:[%s233 + $0x70] sm:$0xff]
        %v291 = vld [vmem:[%s233 + $0x78] sm:$0xff]
        %v292 = vld [vmem:[%s233 + $0x80] sm:$0xff]
        %v293 = vld [vmem:[%s233 + $0x88] sm:$0xff]
        %v294 = vld [vmem:[%s233 + $0x90] sm:$0xff]
        %v295 = vld [vmem:[%s233 + $0x98] sm:$0xff]
        %v296 = vld [vmem:[%s233 + $0xa0] sm:$0xff]
        %v297 = vld [vmem:[%s233 + $0xa8] sm:$0xff]
        %v298 = vld [vmem:[%s233 + $0xb0] sm:$0xff]
        %v299 = vld [vmem:[%s233 + $0xb8] sm:$0xff]
        %v300 = vld [vmem:[%s233 + $0xc0] sm:$0xff]
        %v301 = vld [vmem:[%s233 + $0xc8] sm:$0xff]
        %v302 = vld [vmem:[%s233 + $0xd0] sm:$0xff]
        %v303 = vld [vmem:[%s233 + $0xd8] sm:$0xff]
        %v304 = vld [vmem:[%s233 + $0xe0] sm:$0xff]
        %v305 = vld [vmem:[%s233 + $0xe8] sm:$0xff]
        %v306 = vld [vmem:[%s233 + $0xf0] sm:$0xff]
        %v307 = vld [vmem:[%s233 + $0xf8] sm:$0xff]
        %v308 = vld [vmem:[%s233 + $0x100] sm:$0xff]
        %v309 = vld [vmem:[%s233 + $0x108] sm:$0xff]
        %v310 = vld [vmem:[%s233 + $0x110] sm:$0xff]
        %v311 = vld [vmem:[%s233 + $0x118] sm:$0xff]
        %v312 = vld [vmem:[%s233 + $0x120] sm:$0xff]
        %v313 = vld [vmem:[%s233 + $0x128] sm:$0xff]
        %v314 = vld [vmem:[%s233 + $0x130] sm:$0xff]
        %v315 = vld [vmem:[%s233 + $0x138] sm:$0xff]
        %v316 = vld [vmem:[%s233 + $0x140] sm:$0xff]
        %v317 = vld [vmem:[%s233 + $0x148] sm:$0xff]
        %v318 = vld [vmem:[%s233 + $0x150] sm:$0xff]
        %v319 = vld [vmem:[%s233 + $0x158] sm:$0xff]
        %v320 = vld [vmem:[%s233 + $0x160] sm:$0xff]
        %v321 = vld [vmem:[%s233 + $0x168] sm:$0xff]
        %v322 = vld [vmem:[%s233 + $0x170] sm:$0xff]
        %v323 = vld [vmem:[%s233 + $0x178] sm:$0xff]
        %v324 = vld [vmem:[%s233 + $0x180] sm:$0xff]
        %v325 = vld [vmem:[%s233 + $0x188] sm:$0xff]
        %v326 = vld [vmem:[%s233 + $0x190] sm:$0xff]
        %v327 = vld [vmem:[%s233 + $0x198] sm:$0xff]
        %v328 = vld [vmem:[%s233 + $0x1a0] sm:$0xff]
        %v329 = vld [vmem:[%s233 + $0x1a8] sm:$0xff]
        %v330 = vld [vmem:[%s233 + $0x1b0] sm:$0xff]
        %v331 = vld [vmem:[%s233 + $0x1b8] sm:$0xff]
        %v332 = vld [vmem:[%s233 + $0x1c0] sm:$0xff]
        %v333 = vld [vmem:[%s233 + $0x1c8] sm:$0xff]
        %v334 = vld [vmem:[%s233 + $0x1d0] sm:$0xff]
        %v335 = vld [vmem:[%s233 + $0x1d8] sm:$0xff]
        %v336 = vld [vmem:[%s233 + $0x1e0] sm:$0xff]
        %v337 = vld [vmem:[%s233 + $0x1e8] sm:$0xff]
        %v338 = vld [vmem:[%s233 + $0x1f0] sm:$0xff]
        %v339 = vld [vmem:[%s233 + $0x1f8] sm:$0xff]
        %v340 = vld [vmem:[#allocation5] sm:$0xff]
        %v341 = vld [vmem:[#allocation5 + $0x8] sm:$0xff]
        %v342 = vld [vmem:[#allocation5 + $0x10] sm:$0xff]
        %v343 = vld [vmem:[#allocation5 + $0x18] sm:$0xff]
        %v344 = vld [vmem:[#allocation5 + $0x20] sm:$0xff]
        %v345 = vld [vmem:[#allocation5 + $0x28] sm:$0xff]
        %v346 = vld [vmem:[#allocation5 + $0x30] sm:$0xff]
        %v347 = vld [vmem:[#allocation5 + $0x38] sm:$0xff]
        %v348 = vld [vmem:[#allocation5 + $0x40] sm:$0xff]
        %v349 = vld [vmem:[#allocation5 + $0x48] sm:$0xff]
        %v350 = vld [vmem:[#allocation5 + $0x50] sm:$0xff]
        %v351 = vld [vmem:[#allocation5 + $0x58] sm:$0xff]
        %v352 = vld [vmem:[#allocation5 + $0x60] sm:$0xff]
        %v353 = vld [vmem:[#allocation5 + $0x68] sm:$0xff]
        %v354 = vld [vmem:[#allocation5 + $0x70] sm:$0xff]
        %v355 = vld [vmem:[#allocation5 + $0x78] sm:$0xff]
        %v356 = vld [vmem:[#allocation5 + $0x80] sm:$0xff]
        %v357 = vld [vmem:[#allocation5 + $0x88] sm:$0xff]
        %v358 = vld [vmem:[#allocation5 + $0x90] sm:$0xff]
        %v359 = vld [vmem:[#allocation5 + $0x98] sm:$0xff]
        %v360 = vld [vmem:[#allocation5 + $0xa0] sm:$0xff]
        %v361 = vld [vmem:[#allocation5 + $0xa8] sm:$0xff]
        %v362 = vld [vmem:[#allocation5 + $0xb0] sm:$0xff]
        %v363 = vld [vmem:[#allocation5 + $0xb8] sm:$0xff]
        %v364 = vld [vmem:[#allocation5 + $0xc0] sm:$0xff]
        %v365 = vld [vmem:[#allocation5 + $0xc8] sm:$0xff]
        %v366 = vld [vmem:[#allocation5 + $0xd0] sm:$0xff]
        %v367 = vld [vmem:[#allocation5 + $0xd8] sm:$0xff]
        %v368 = vld [vmem:[#allocation5 + $0xe0] sm:$0xff]
        %v369 = vld [vmem:[#allocation5 + $0xe8] sm:$0xff]
        %v370 = vld [vmem:[#allocation5 + $0xf0] sm:$0xff]
        %v371 = vld [vmem:[#allocation5 + $0xf8] sm:$0xff]
        %v372 = vld [vmem:[#allocation5 + $0x100] sm:$0xff]
        %v373 = vld [vmem:[#allocation5 + $0x108] sm:$0xff]
        %v374 = vld [vmem:[#allocation5 + $0x110] sm:$0xff]
        %v375 = vld [vmem:[#allocation5 + $0x118] sm:$0xff]
        %v376 = vld [vmem:[#allocation5 + $0x120] sm:$0xff]
        %v377 = vld [vmem:[#allocation5 + $0x128] sm:$0xff]
        %v378 = vld [vmem:[#allocation5 + $0x130] sm:$0xff]
        %v379 = vld [vmem:[#allocation5 + $0x138] sm:$0xff]
        %v380 = vld [vmem:[#allocation5 + $0x140] sm:$0xff]
        %v381 = vld [vmem:[#allocation5 + $0x148] sm:$0xff]
        %v382 = vld [vmem:[#allocation5 + $0x150] sm:$0xff]
        %v383 = vld [vmem:[#allocation5 + $0x158] sm:$0xff]
        %v384 = vld [vmem:[#allocation5 + $0x160] sm:$0xff]
        %v385 = vld [vmem:[#allocation5 + $0x168] sm:$0xff]
        %v386 = vld [vmem:[#allocation5 + $0x170] sm:$0xff]
        %v387 = vld [vmem:[#allocation5 + $0x178] sm:$0xff]
        %v388 = vld [vmem:[#allocation5 + $0x180] sm:$0xff]
        %v389 = vld [vmem:[#allocation5 + $0x188] sm:$0xff]
        %v390 = vld [vmem:[#allocation5 + $0x190] sm:$0xff]
        %v391 = vld [vmem:[#allocation5 + $0x198] sm:$0xff]
        %v392 = vld [vmem:[#allocation5 + $0x1a0] sm:$0xff]
        %v393 = vld [vmem:[#allocation5 + $0x1a8] sm:$0xff]
        %v394 = vld [vmem:[#allocation5 + $0x1b0] sm:$0xff]
        %v395 = vld [vmem:[#allocation5 + $0x1b8] sm:$0xff]
        %v396 = vld [vmem:[#allocation5 + $0x1c0] sm:$0xff]
        %v397 = vld [vmem:[#allocation5 + $0x1c8] sm:$0xff]
        %v398 = vld [vmem:[#allocation5 + $0x1d0] sm:$0xff]
        %v399 = vld [vmem:[#allocation5 + $0x1d8] sm:$0xff]
        %v400 = vld [vmem:[#allocation5 + $0x1e0] sm:$0xff]
        %v401 = vld [vmem:[#allocation5 + $0x1e8] sm:$0xff]
        %v402 = vld [vmem:[#allocation5 + $0x1f0] sm:$0xff]
        %v403 = vld [vmem:[#allocation5 + $0x1f8] sm:$0xff]
        %404 = vmatprep.subr.mxu0 %v341
        %405 = vmatpush1.msra.mxu0 %v340
        %406 = vmatprep.subr.mxu0 %v343
        %407 = vmatpush1.msra.mxu0 %v342
        %408 = vmatprep.subr.mxu0 %v345
        %409 = vmatpush1.msra.mxu0 %v344
        %410 = vmatprep.subr.mxu0 %v347
        %411 = vmatpush1.msra.mxu0 %v346
        %412 = vmatprep.subr.mxu0 %v349
        %413 = vmatpush1.msra.mxu0 %v348
        %414 = vmatprep.subr.mxu0 %v351
        %415 = vmatpush1.msra.mxu0 %v350
        %416 = vmatprep.subr.mxu0 %v353
        %417 = vmatpush1.msra.mxu0 %v352
        %418 = vmatprep.subr.mxu0 %v355
        %419 = vmatpush1.msra.mxu0 %v354
        %420 = vmatprep.subr.mxu0 %v357
        %421 = vmatpush1.msra.mxu0 %v356
        %422 = vmatprep.subr.mxu0 %v359
        %423 = vmatpush1.msra.mxu0 %v358
        %424 = vmatprep.subr.mxu0 %v361
        %425 = vmatpush1.msra.mxu0 %v360
        %426 = vmatprep.subr.mxu0 %v363
        %427 = vmatpush1.msra.mxu0 %v362
        %428 = vmatprep.subr.mxu0 %v365
        %429 = vmatpush1.msra.mxu0 %v364
        %430 = vmatprep.subr.mxu0 %v367
        %431 = vmatpush1.msra.mxu0 %v366
        %432 = vmatprep.subr.mxu0 %v369
        %433 = vmatpush1.msra.mxu0 %v368
        %434 = vmatprep.subr.mxu0 %v371
        %435 = vmatpush1.msra.mxu0 %v370
        %436 = vmatprep.subr.mxu0 %v373
        %437 = vmatpush1.msra.mxu0 %v372
        %438 = vmatprep.subr.mxu0 %v375
        %439 = vmatpush1.msra.mxu0 %v374
        %440 = vmatprep.subr.mxu0 %v377
        %441 = vmatpush1.msra.mxu0 %v376
        %442 = vmatprep.subr.mxu0 %v379
        %443 = vmatpush1.msra.mxu0 %v378
        %444 = vmatprep.subr.mxu0 %v381
        %445 = vmatpush1.msra.mxu0 %v380
        %446 = vmatprep.subr.mxu0 %v383
        %447 = vmatpush1.msra.mxu0 %v382
        %448 = vmatprep.subr.mxu0 %v385
        %449 = vmatpush1.msra.mxu0 %v384
        %450 = vmatprep.subr.mxu0 %v387
        %451 = vmatpush1.msra.mxu0 %v386
        %452 = vmatprep.subr.mxu0 %v389
        %453 = vmatpush1.msra.mxu0 %v388
        %454 = vmatprep.subr.mxu0 %v391
        %455 = vmatpush1.msra.mxu0 %v390
        %456 = vmatprep.subr.mxu0 %v393
        %457 = vmatpush1.msra.mxu0 %v392
        %458 = vmatprep.subr.mxu0 %v395
        %459 = vmatpush1.msra.mxu0 %v394
        %460 = vmatprep.subr.mxu0 %v397
        %461 = vmatpush1.msra.mxu0 %v396
        %462 = vmatprep.subr.mxu0 %v399
        %463 = vmatpush1.msra.mxu0 %v398
        %464 = vmatprep.subr.mxu0 %v401
        %465 = vmatpush1.msra.mxu0 %v400
        %466 = vmatprep.subr.mxu0 %v403
        %467 = vmatpush1.msra.mxu0 %v402
        %468 = vmatprep.mubr.f32.mxu0 %v277
        %469 = vmatmul.mubr.f32.gmra.mrb[0].mxu0 %v276
        %v470 = vpop.f32.mrb[0].mxu0
        %v471 = vadd.f32 0.0, %v470
        %v472 = vpop.f32.mrb[0].mxu0
        %v473 = vadd.f32 0.0, %v472
        %474 = vmatprep.mubr.f32.mxu0 %v279
        %475 = vmatmul.mubr.f32.gmra.mrb[0].mxu0 %v278
        %v476 = vpop.f32.mrb[0].mxu0
        %v477 = vadd.f32 0.0, %v476
        %v478 = vpop.f32.mrb[0].mxu0
        %v479 = vadd.f32 0.0, %v478
        %480 = vmatprep.mubr.f32.mxu0 %v281
        %481 = vmatmul.mubr.f32.gmra.mrb[0].mxu0 %v280
        %v482 = vpop.f32.mrb[0].mxu0
        %v483 = vadd.f32 0.0, %v482
        %v484 = vpop.f32.mrb[0].mxu0
        %v485 = vadd.f32 0.0, %v484
        %486 = vmatprep.mubr.f32.mxu0 %v283
        %487 = vmatmul.mubr.f32.gmra.mrb[0].mxu0 %v282
        %v488 = vpop.f32.mrb[0].mxu0
        %v489 = vadd.f32 0.0, %v488
        %v490 = vpop.f32.mrb[0].mxu0
        %v491 = vadd.f32 0.0, %v490
        %492 = vmatprep.mubr.f32.mxu0 %v285
        %493 = vmatmul.mubr.f32.gmra.mrb[0].mxu0 %v284
        %v494 = vpop.f32.mrb[0].mxu0
        %v495 = vadd.f32 0.0, %v494
        %v496 = vpop.f32.mrb[0].mxu0
        %v497 = vadd.f32 0.0, %v496
        %498 = vmatprep.mubr.f32.mxu0 %v287
        %499 = vmatmul.mubr.f32.gmra.mrb[0].mxu0 %v286
        %v500 = vpop.f32.mrb[0].mxu0
        %v501 = vadd.f32 0.0, %v500
        %v502 = vpop.f32.mrb[0].mxu0
        %v503 = vadd.f32 0.0, %v502
        %504 = vmatprep.mubr.f32.mxu0 %v289
        %505 = vmatmul.mubr.f32.gmra.mrb[0].mxu0 %v288
        %v506 = vpop.f32.mrb[0].mxu0
        %v507 = vadd.f32 0.0, %v506
        %v508 = vpop.f32.mrb[0].mxu0
        %v509 = vadd.f32 0.0, %v508
        %510 = vmatprep.mubr.f32.mxu0 %v291
        %511 = vmatmul.mubr.f32.gmra.mrb[0].mxu0 %v290
        %v512 = vpop.f32.mrb[0].mxu0
        %v513 = vadd.f32 0.0, %v512
        %v514 = vpop.f32.mrb[0].mxu0
        %v515 = vadd.f32 0.0, %v514
        %516 = vmatprep.mubr.f32.mxu0 %v293
        %517 = vmatmul.mubr.f32.gmra.mrb[0].mxu0 %v292
        %v518 = vpop.f32.mrb[0].mxu0
        %v519 = vadd.f32 0.0, %v518
        %v520 = vpop.f32.mrb[0].mxu0
        %v521 = vadd.f32 0.0, %v520
        %522 = vmatprep.mubr.f32.mxu0 %v295
        %523 = vmatmul.mubr.f32.gmra.mrb[0].mxu0 %v294
        %v524 = vpop.f32.mrb[0].mxu0
        %v525 = vadd.f32 0.0, %v524
        %v526 = vpop.f32.mrb[0].mxu0
        %v527 = vadd.f32 0.0, %v526
        %528 = vmatprep.mubr.f32.mxu0 %v297
        %529 = vmatmul.mubr.f32.gmra.mrb[0].mxu0 %v296
        %v530 = vpop.f32.mrb[0].mxu0
        %v531 = vadd.f32 0.0, %v530
        %v532 = vpop.f32.mrb[0].mxu0
        %v533 = vadd.f32 0.0, %v532
        %534 = vmatprep.mubr.f32.mxu0 %v299
        %535 = vmatmul.mubr.f32.gmra.mrb[0].mxu0 %v298
        %v536 = vpop.f32.mrb[0].mxu0
        %v537 = vadd.f32 0.0, %v536
        %v538 = vpop.f32.mrb[0].mxu0
        %v539 = vadd.f32 0.0, %v538
        %540 = vmatprep.mubr.f32.mxu0 %v301
        %541 = vmatmul.mubr.f32.gmra.mrb[0].mxu0 %v300
        %v542 = vpop.f32.mrb[0].mxu0
        %v543 = vadd.f32 0.0, %v542
        %v544 = vpop.f32.mrb[0].mxu0
        %v545 = vadd.f32 0.0, %v544
        %546 = vmatprep.mubr.f32.mxu0 %v303
        %547 = vmatmul.mubr.f32.gmra.mrb[0].mxu0 %v302
        %v548 = vpop.f32.mrb[0].mxu0
        %v549 = vadd.f32 0.0, %v548
        %v550 = vpop.f32.mrb[0].mxu0
        %v551 = vadd.f32 0.0, %v550
        %552 = vmatprep.mubr.f32.mxu0 %v305
        %553 = vmatmul.mubr.f32.gmra.mrb[0].mxu0 %v304
        %v554 = vpop.f32.mrb[0].mxu0
        %v555 = vadd.f32 0.0, %v554
        %v556 = vpop.f32.mrb[0].mxu0
        %v557 = vadd.f32 0.0, %v556
        %558 = vmatprep.mubr.f32.mxu0 %v307
        %559 = vmatmul.mubr.f32.gmra.mrb[0].mxu0 %v306
        %v560 = vpop.f32.mrb[0].mxu0
        %v561 = vadd.f32 0.0, %v560
        %v562 = vpop.f32.mrb[0].mxu0
        %v563 = vadd.f32 0.0, %v562
        %564 = vmatprep.mubr.f32.mxu0 %v309
        %565 = vmatmul.mubr.f32.gmra.mrb[0].mxu0 %v308
        %v566 = vpop.f32.mrb[0].mxu0
        %v567 = vadd.f32 0.0, %v566
        %v568 = vpop.f32.mrb[0].mxu0
        %v569 = vadd.f32 0.0, %v568
        %570 = vmatprep.mubr.f32.mxu0 %v311
        %571 = vmatmul.mubr.f32.gmra.mrb[0].mxu0 %v310
        %v572 = vpop.f32.mrb[0].mxu0
        %v573 = vadd.f32 0.0, %v572
        %v574 = vpop.f32.mrb[0].mxu0
        %v575 = vadd.f32 0.0, %v574
        %576 = vmatprep.mubr.f32.mxu0 %v313
        %577 = vmatmul.mubr.f32.gmra.mrb[0].mxu0 %v312
        %v578 = vpop.f32.mrb[0].mxu0
        %v579 = vadd.f32 0.0, %v578
        %v580 = vpop.f32.mrb[0].mxu0
        %v581 = vadd.f32 0.0, %v580
        %582 = vmatprep.mubr.f32.mxu0 %v315
        %583 = vmatmul.mubr.f32.gmra.mrb[0].mxu0 %v314
        %v584 = vpop.f32.mrb[0].mxu0
        %v585 = vadd.f32 0.0, %v584
        %v586 = vpop.f32.mrb[0].mxu0
        %v587 = vadd.f32 0.0, %v586
        %588 = vmatprep.mubr.f32.mxu0 %v317
        %589 = vmatmul.mubr.f32.gmra.mrb[0].mxu0 %v316
        %v590 = vpop.f32.mrb[0].mxu0
        %v591 = vadd.f32 0.0, %v590
        %v592 = vpop.f32.mrb[0].mxu0
        %v593 = vadd.f32 0.0, %v592
        %594 = vmatprep.mubr.f32.mxu0 %v319
        %595 = vmatmul.mubr.f32.gmra.mrb[0].mxu0 %v318
        %v596 = vpop.f32.mrb[0].mxu0
        %v597 = vadd.f32 0.0, %v596
        %v598 = vpop.f32.mrb[0].mxu0
        %v599 = vadd.f32 0.0, %v598
        %600 = vmatprep.mubr.f32.mxu0 %v321
        %601 = vmatmul.mubr.f32.gmra.mrb[0].mxu0 %v320
        %v602 = vpop.f32.mrb[0].mxu0
        %v603 = vadd.f32 0.0, %v602
        %v604 = vpop.f32.mrb[0].mxu0
        %v605 = vadd.f32 0.0, %v604
        %606 = vmatprep.mubr.f32.mxu0 %v323
        %607 = vmatmul.mubr.f32.gmra.mrb[0].mxu0 %v322
        %v608 = vpop.f32.mrb[0].mxu0
        %v609 = vadd.f32 0.0, %v608
        %v610 = vpop.f32.mrb[0].mxu0
        %v611 = vadd.f32 0.0, %v610
        %612 = vmatprep.mubr.f32.mxu0 %v325
        %613 = vmatmul.mubr.f32.gmra.mrb[0].mxu0 %v324
        %v614 = vpop.f32.mrb[0].mxu0
        %v615 = vadd.f32 0.0, %v614
        %v616 = vpop.f32.mrb[0].mxu0
        %v617 = vadd.f32 0.0, %v616
        %618 = vmatprep.mubr.f32.mxu0 %v327
        %619 = vmatmul.mubr.f32.gmra.mrb[0].mxu0 %v326
        %v620 = vpop.f32.mrb[0].mxu0
        %v621 = vadd.f32 0.0, %v620
        %v622 = vpop.f32.mrb[0].mxu0
        %v623 = vadd.f32 0.0, %v622
        %624 = vmatprep.mubr.f32.mxu0 %v329
        %625 = vmatmul.mubr.f32.gmra.mrb[0].mxu0 %v328
        %v626 = vpop.f32.mrb[0].mxu0
        %v627 = vadd.f32 0.0, %v626
        %v628 = vpop.f32.mrb[0].mxu0
        %v629 = vadd.f32 0.0, %v628
        %630 = vmatprep.mubr.f32.mxu0 %v331
        %631 = vmatmul.mubr.f32.gmra.mrb[0].mxu0 %v330
        %v632 = vpop.f32.mrb[0].mxu0
        %v633 = vadd.f32 0.0, %v632
        %v634 = vpop.f32.mrb[0].mxu0
        %v635 = vadd.f32 0.0, %v634
        %636 = vmatprep.mubr.f32.mxu0 %v333
        %637 = vmatmul.mubr.f32.gmra.mrb[0].mxu0 %v332
        %v638 = vpop.f32.mrb[0].mxu0
        %v639 = vadd.f32 0.0, %v638
        %v640 = vpop.f32.mrb[0].mxu0
        %v641 = vadd.f32 0.0, %v640
        %642 = vmatprep.mubr.f32.mxu0 %v335
        %643 = vmatmul.mubr.f32.gmra.mrb[0].mxu0 %v334
        %v644 = vpop.f32.mrb[0].mxu0
        %v645 = vadd.f32 0.0, %v644
        %v646 = vpop.f32.mrb[0].mxu0
        %v647 = vadd.f32 0.0, %v646
        %648 = vmatprep.mubr.f32.mxu0 %v337
        %649 = vmatmul.mubr.f32.gmra.mrb[0].mxu0 %v336
        %v650 = vpop.f32.mrb[0].mxu0
        %v651 = vadd.f32 0.0, %v650
        %v652 = vpop.f32.mrb[0].mxu0
        %v653 = vadd.f32 0.0, %v652
        %654 = vmatprep.mubr.f32.mxu0 %v339
        %655 = vmatmul.mubr.f32.gmra.mrb[0].mxu0 %v338
        %v656 = vpop.f32.mrb[0].mxu0
        %v657 = vadd.f32 0.0, %v656
        %v658 = vpop.f32.mrb[0].mxu0
        %v659 = vadd.f32 0.0, %v658
        %660 = vdwg.mxu0
        %661 = vst [vmem:[%s257] sm:$0xff] %v471
        %662 = vst [vmem:[%s257 + $0x8] sm:$0xff] %v477
        %663 = vst [vmem:[%s257 + $0x10] sm:$0xff] %v483
        %664 = vst [vmem:[%s257 + $0x18] sm:$0xff] %v489
        %665 = vst [vmem:[%s257 + $0x20] sm:$0xff] %v495
        %666 = vst [vmem:[%s257 + $0x28] sm:$0xff] %v501
        %667 = vst [vmem:[%s257 + $0x30] sm:$0xff] %v507
        %668 = vst [vmem:[%s257 + $0x38] sm:$0xff] %v513
        %669 = vst [vmem:[%s257 + $0x40] sm:$0xff] %v519
        %670 = vst [vmem:[%s257 + $0x48] sm:$0xff] %v525
        %671 = vst [vmem:[%s257 + $0x50] sm:$0xff] %v531
        %672 = vst [vmem:[%s257 + $0x58] sm:$0xff] %v537
        %673 = vst [vmem:[%s257 + $0x60] sm:$0xff] %v543
        %674 = vst [vmem:[%s257 + $0x68] sm:$0xff] %v549
        %675 = vst [vmem:[%s257 + $0x70] sm:$0xff] %v555
        %676 = vst [vmem:[%s257 + $0x78] sm:$0xff] %v561
        %677 = vst [vmem:[%s257 + $0x80] sm:$0xff] %v567
        %678 = vst [vmem:[%s257 + $0x88] sm:$0xff] %v573
        %679 = vst [vmem:[%s257 + $0x90] sm:$0xff] %v579
        %680 = vst [vmem:[%s257 + $0x98] sm:$0xff] %v585
        %681 = vst [vmem:[%s257 + $0xa0] sm:$0xff] %v591
        %682 = vst [vmem:[%s257 + $0xa8] sm:$0xff] %v597
        %683 = vst [vmem:[%s257 + $0xb0] sm:$0xff] %v603
        %684 = vst [vmem:[%s257 + $0xb8] sm:$0xff] %v609
        %685 = vst [vmem:[%s257 + $0xc0] sm:$0xff] %v615
        %686 = vst [vmem:[%s257 + $0xc8] sm:$0xff] %v621
        %687 = vst [vmem:[%s257 + $0xd0] sm:$0xff] %v627
        %688 = vst [vmem:[%s257 + $0xd8] sm:$0xff] %v633
        %689 = vst [vmem:[%s257 + $0xe0] sm:$0xff] %v639
        %690 = vst [vmem:[%s257 + $0xe8] sm:$0xff] %v645
        %691 = vst [vmem:[%s257 + $0xf0] sm:$0xff] %v651
        %692 = vst [vmem:[%s257 + $0xf8] sm:$0xff] %v657
        %s693 = scalar_lea.vmem %s257, 256 [#allocation7]
        %694 = vst [vmem:[%s693] sm:$0xff] %v473
        %695 = vst [vmem:[%s693 + $0x8] sm:$0xff] %v479
        %696 = vst [vmem:[%s693 + $0x10] sm:$0xff] %v485
        %697 = vst [vmem:[%s693 + $0x18] sm:$0xff] %v491
        %698 = vst [vmem:[%s693 + $0x20] sm:$0xff] %v497
        %699 = vst [vmem:[%s693 + $0x28] sm:$0xff] %v503
        %700 = vst [vmem:[%s693 + $0x30] sm:$0xff] %v509
        %701 = vst [vmem:[%s693 + $0x38] sm:$0xff] %v515
        %702 = vst [vmem:[%s693 + $0x40] sm:$0xff] %v521
        %703 = vst [vmem:[%s693 + $0x48] sm:$0xff] %v527
        %704 = vst [vmem:[%s693 + $0x50] sm:$0xff] %v533
        %705 = vst [vmem:[%s693 + $0x58] sm:$0xff] %v539
        %706 = vst [vmem:[%s693 + $0x60] sm:$0xff] %v545
        %707 = vst [vmem:[%s693 + $0x68] sm:$0xff] %v551
        %708 = vst [vmem:[%s693 + $0x70] sm:$0xff] %v557
        %709 = vst [vmem:[%s693 + $0x78] sm:$0xff] %v563
        %710 = vst [vmem:[%s693 + $0x80] sm:$0xff] %v569
        %711 = vst [vmem:[%s693 + $0x88] sm:$0xff] %v575
        %712 = vst [vmem:[%s693 + $0x90] sm:$0xff] %v581
        %713 = vst [vmem:[%s693 + $0x98] sm:$0xff] %v587
        %714 = vst [vmem:[%s693 + $0xa0] sm:$0xff] %v593
        %715 = vst [vmem:[%s693 + $0xa8] sm:$0xff] %v599
        %716 = vst [vmem:[%s693 + $0xb0] sm:$0xff] %v605
        %717 = vst [vmem:[%s693 + $0xb8] sm:$0xff] %v611
        %718 = vst [vmem:[%s693 + $0xc0] sm:$0xff] %v617
        %719 = vst [vmem:[%s693 + $0xc8] sm:$0xff] %v623
        %720 = vst [vmem:[%s693 + $0xd0] sm:$0xff] %v629
        %721 = vst [vmem:[%s693 + $0xd8] sm:$0xff] %v635
        %722 = vst [vmem:[%s693 + $0xe0] sm:$0xff] %v641
        %723 = vst [vmem:[%s693 + $0xe8] sm:$0xff] %v647
        %724 = vst [vmem:[%s693 + $0xf0] sm:$0xff] %v653
        %725 = vst [vmem:[%s693 + $0xf8] sm:$0xff] %v659
        %s726 = scalar_lea.vmem [#allocation5], 512
        %v727 = vld [vmem:[%s726] sm:$0xff]
        %v728 = vld [vmem:[%s726 + $0x8] sm:$0xff]
        %v729 = vld [vmem:[%s726 + $0x10] sm:$0xff]
        %v730 = vld [vmem:[%s726 + $0x18] sm:$0xff]
        %v731 = vld [vmem:[%s726 + $0x20] sm:$0xff]
        %v732 = vld [vmem:[%s726 + $0x28] sm:$0xff]
        %v733 = vld [vmem:[%s726 + $0x30] sm:$0xff]
        %v734 = vld [vmem:[%s726 + $0x38] sm:$0xff]
        %v735 = vld [vmem:[%s726 + $0x40] sm:$0xff]
        %v736 = vld [vmem:[%s726 + $0x48] sm:$0xff]
        %v737 = vld [vmem:[%s726 + $0x50] sm:$0xff]
        %v738 = vld [vmem:[%s726 + $0x58] sm:$0xff]
        %v739 = vld [vmem:[%s726 + $0x60] sm:$0xff]
        %v740 = vld [vmem:[%s726 + $0x68] sm:$0xff]
        %v741 = vld [vmem:[%s726 + $0x70] sm:$0xff]
        %v742 = vld [vmem:[%s726 + $0x78] sm:$0xff]
        %v743 = vld [vmem:[%s726 + $0x80] sm:$0xff]
        %v744 = vld [vmem:[%s726 + $0x88] sm:$0xff]
        %v745 = vld [vmem:[%s726 + $0x90] sm:$0xff]
        %v746 = vld [vmem:[%s726 + $0x98] sm:$0xff]
        %v747 = vld [vmem:[%s726 + $0xa0] sm:$0xff]
        %v748 = vld [vmem:[%s726 + $0xa8] sm:$0xff]
        %v749 = vld [vmem:[%s726 + $0xb0] sm:$0xff]
        %v750 = vld [vmem:[%s726 + $0xb8] sm:$0xff]
        %v751 = vld [vmem:[%s726 + $0xc0] sm:$0xff]
        %v752 = vld [vmem:[%s726 + $0xc8] sm:$0xff]
        %v753 = vld [vmem:[%s726 + $0xd0] sm:$0xff]
        %v754 = vld [vmem:[%s726 + $0xd8] sm:$0xff]
        %v755 = vld [vmem:[%s726 + $0xe0] sm:$0xff]
        %v756 = vld [vmem:[%s726 + $0xe8] sm:$0xff]
        %v757 = vld [vmem:[%s726 + $0xf0] sm:$0xff]
        %v758 = vld [vmem:[%s726 + $0xf8] sm:$0xff]
        %v759 = vld [vmem:[%s726 + $0x100] sm:$0xff]
        %v760 = vld [vmem:[%s726 + $0x108] sm:$0xff]
        %v761 = vld [vmem:[%s726 + $0x110] sm:$0xff]
        %v762 = vld [vmem:[%s726 + $0x118] sm:$0xff]
        %v763 = vld [vmem:[%s726 + $0x120] sm:$0xff]
        %v764 = vld [vmem:[%s726 + $0x128] sm:$0xff]
        %v765 = vld [vmem:[%s726 + $0x130] sm:$0xff]
        %v766 = vld [vmem:[%s726 + $0x138] sm:$0xff]
        %v767 = vld [vmem:[%s726 + $0x140] sm:$0xff]
        %v768 = vld [vmem:[%s726 + $0x148] sm:$0xff]
        %v769 = vld [vmem:[%s726 + $0x150] sm:$0xff]
        %v770 = vld [vmem:[%s726 + $0x158] sm:$0xff]
        %v771 = vld [vmem:[%s726 + $0x160] sm:$0xff]
        %v772 = vld [vmem:[%s726 + $0x168] sm:$0xff]
        %v773 = vld [vmem:[%s726 + $0x170] sm:$0xff]
        %v774 = vld [vmem:[%s726 + $0x178] sm:$0xff]
        %v775 = vld [vmem:[%s726 + $0x180] sm:$0xff]
        %v776 = vld [vmem:[%s726 + $0x188] sm:$0xff]
        %v777 = vld [vmem:[%s726 + $0x190] sm:$0xff]
        %v778 = vld [vmem:[%s726 + $0x198] sm:$0xff]
        %v779 = vld [vmem:[%s726 + $0x1a0] sm:$0xff]
        %v780 = vld [vmem:[%s726 + $0x1a8] sm:$0xff]
        %v781 = vld [vmem:[%s726 + $0x1b0] sm:$0xff]
        %v782 = vld [vmem:[%s726 + $0x1b8] sm:$0xff]
        %v783 = vld [vmem:[%s726 + $0x1c0] sm:$0xff]
        %v784 = vld [vmem:[%s726 + $0x1c8] sm:$0xff]
        %v785 = vld [vmem:[%s726 + $0x1d0] sm:$0xff]
        %v786 = vld [vmem:[%s726 + $0x1d8] sm:$0xff]
        %v787 = vld [vmem:[%s726 + $0x1e0] sm:$0xff]
        %v788 = vld [vmem:[%s726 + $0x1e8] sm:$0xff]
        %v789 = vld [vmem:[%s726 + $0x1f0] sm:$0xff]
        %v790 = vld [vmem:[%s726 + $0x1f8] sm:$0xff]
        %791 = vmatprep.subr.mxu0 %v728
        %792 = vmatpush1.msra.mxu0 %v727
        %793 = vmatprep.subr.mxu0 %v730
        %794 = vmatpush1.msra.mxu0 %v729
        %795 = vmatprep.subr.mxu0 %v732
        %796 = vmatpush1.msra.mxu0 %v731
        %797 = vmatprep.subr.mxu0 %v734
        %798 = vmatpush1.msra.mxu0 %v733
        %799 = vmatprep.subr.mxu0 %v736
        %800 = vmatpush1.msra.mxu0 %v735
        %801 = vmatprep.subr.mxu0 %v738
        %802 = vmatpush1.msra.mxu0 %v737
        %803 = vmatprep.subr.mxu0 %v740
        %804 = vmatpush1.msra.mxu0 %v739
        %805 = vmatprep.subr.mxu0 %v742
        %806 = vmatpush1.msra.mxu0 %v741
        %807 = vmatprep.subr.mxu0 %v744
        %808 = vmatpush1.msra.mxu0 %v743
        %809 = vmatprep.subr.mxu0 %v746
        %810 = vmatpush1.msra.mxu0 %v745
        %811 = vmatprep.subr.mxu0 %v748
        %812 = vmatpush1.msra.mxu0 %v747
        %813 = vmatprep.subr.mxu0 %v750
        %814 = vmatpush1.msra.mxu0 %v749
        %815 = vmatprep.subr.mxu0 %v752
        %816 = vmatpush1.msra.mxu0 %v751
        %817 = vmatprep.subr.mxu0 %v754
        %818 = vmatpush1.msra.mxu0 %v753
        %819 = vmatprep.subr.mxu0 %v756
        %820 = vmatpush1.msra.mxu0 %v755
        %821 = vmatprep.subr.mxu0 %v758
        %822 = vmatpush1.msra.mxu0 %v757
        %823 = vmatprep.subr.mxu0 %v760
        %824 = vmatpush1.msra.mxu0 %v759
        %825 = vmatprep.subr.mxu0 %v762
        %826 = vmatpush1.msra.mxu0 %v761
        %827 = vmatprep.subr.mxu0 %v764
        %828 = vmatpush1.msra.mxu0 %v763
        %829 = vmatprep.subr.mxu0 %v766
        %830 = vmatpush1.msra.mxu0 %v765
        %831 = vmatprep.subr.mxu0 %v768
        %832 = vmatpush1.msra.mxu0 %v767
        %833 = vmatprep.subr.mxu0 %v770
        %834 = vmatpush1.msra.mxu0 %v769
        %835 = vmatprep.subr.mxu0 %v772
        %836 = vmatpush1.msra.mxu0 %v771
        %837 = vmatprep.subr.mxu0 %v774
        %838 = vmatpush1.msra.mxu0 %v773
        %839 = vmatprep.subr.mxu0 %v776
        %840 = vmatpush1.msra.mxu0 %v775
        %841 = vmatprep.subr.mxu0 %v778
        %842 = vmatpush1.msra.mxu0 %v777
        %843 = vmatprep.subr.mxu0 %v780
        %844 = vmatpush1.msra.mxu0 %v779
        %845 = vmatprep.subr.mxu0 %v782
        %846 = vmatpush1.msra.mxu0 %v781
        %847 = vmatprep.subr.mxu0 %v784
        %848 = vmatpush1.msra.mxu0 %v783
        %849 = vmatprep.subr.mxu0 %v786
        %850 = vmatpush1.msra.mxu0 %v785
        %851 = vmatprep.subr.mxu0 %v788
        %852 = vmatpush1.msra.mxu0 %v787
        %853 = vmatprep.subr.mxu0 %v790
        %854 = vmatpush1.msra.mxu0 %v789
        %855 = vmatprep.mubr.f32.mxu0 %v277
        %856 = vmatmul.mubr.f32.gmra.mrb[0].mxu0 %v276
        %v857 = vpop.f32.mrb[0].mxu0
        %v858 = vadd.f32 0.0, %v857
        %v859 = vpop.f32.mrb[0].mxu0
        %v860 = vadd.f32 0.0, %v859
        %861 = vmatprep.mubr.f32.mxu0 %v279
        %862 = vmatmul.mubr.f32.gmra.mrb[0].mxu0 %v278
        %v863 = vpop.f32.mrb[0].mxu0
        %v864 = vadd.f32 0.0, %v863
        %v865 = vpop.f32.mrb[0].mxu0
        %v866 = vadd.f32 0.0, %v865
        %867 = vmatprep.mubr.f32.mxu0 %v281
        %868 = vmatmul.mubr.f32.gmra.mrb[0].mxu0 %v280
        %v869 = vpop.f32.mrb[0].mxu0
        %v870 = vadd.f32 0.0, %v869
        %v871 = vpop.f32.mrb[0].mxu0
        %v872 = vadd.f32 0.0, %v871
        %873 = vmatprep.mubr.f32.mxu0 %v283
        %874 = vmatmul.mubr.f32.gmra.mrb[0].mxu0 %v282
        %v875 = vpop.f32.mrb[0].mxu0
        %v876 = vadd.f32 0.0, %v875
        %v877 = vpop.f32.mrb[0].mxu0
        %v878 = vadd.f32 0.0, %v877
        %879 = vmatprep.mubr.f32.mxu0 %v285
        %880 = vmatmul.mubr.f32.gmra.mrb[0].mxu0 %v284
        %v881 = vpop.f32.mrb[0].mxu0
        %v882 = vadd.f32 0.0, %v881
        %v883 = vpop.f32.mrb[0].mxu0
        %v884 = vadd.f32 0.0, %v883
        %885 = vmatprep.mubr.f32.mxu0 %v287
        %886 = vmatmul.mubr.f32.gmra.mrb[0].mxu0 %v286
        %v887 = vpop.f32.mrb[0].mxu0
        %v888 = vadd.f32 0.0, %v887
        %v889 = vpop.f32.mrb[0].mxu0
        %v890 = vadd.f32 0.0, %v889
        %891 = vmatprep.mubr.f32.mxu0 %v289
        %892 = vmatmul.mubr.f32.gmra.mrb[0].mxu0 %v288
        %v893 = vpop.f32.mrb[0].mxu0
        %v894 = vadd.f32 0.0, %v893
        %v895 = vpop.f32.mrb[0].mxu0
        %v896 = vadd.f32 0.0, %v895
        %897 = vmatprep.mubr.f32.mxu0 %v291
        %898 = vmatmul.mubr.f32.gmra.mrb[0].mxu0 %v290
        %v899 = vpop.f32.mrb[0].mxu0
        %v900 = vadd.f32 0.0, %v899
        %v901 = vpop.f32.mrb[0].mxu0
        %v902 = vadd.f32 0.0, %v901
        %903 = vmatprep.mubr.f32.mxu0 %v293
        %904 = vmatmul.mubr.f32.gmra.mrb[0].mxu0 %v292
        %v905 = vpop.f32.mrb[0].mxu0
        %v906 = vadd.f32 0.0, %v905
        %v907 = vpop.f32.mrb[0].mxu0
        %v908 = vadd.f32 0.0, %v907
        %909 = vmatprep.mubr.f32.mxu0 %v295
        %910 = vmatmul.mubr.f32.gmra.mrb[0].mxu0 %v294
        %v911 = vpop.f32.mrb[0].mxu0
        %v912 = vadd.f32 0.0, %v911
        %v913 = vpop.f32.mrb[0].mxu0
        %v914 = vadd.f32 0.0, %v913
        %915 = vmatprep.mubr.f32.mxu0 %v297
        %916 = vmatmul.mubr.f32.gmra.mrb[0].mxu0 %v296
        %v917 = vpop.f32.mrb[0].mxu0
        %v918 = vadd.f32 0.0, %v917
        %v919 = vpop.f32.mrb[0].mxu0
        %v920 = vadd.f32 0.0, %v919
        %921 = vmatprep.mubr.f32.mxu0 %v299
        %922 = vmatmul.mubr.f32.gmra.mrb[0].mxu0 %v298
        %v923 = vpop.f32.mrb[0].mxu0
        %v924 = vadd.f32 0.0, %v923
        %v925 = vpop.f32.mrb[0].mxu0
        %v926 = vadd.f32 0.0, %v925
        %927 = vmatprep.mubr.f32.mxu0 %v301
        %928 = vmatmul.mubr.f32.gmra.mrb[0].mxu0 %v300
        %v929 = vpop.f32.mrb[0].mxu0
        %v930 = vadd.f32 0.0, %v929
        %v931 = vpop.f32.mrb[0].mxu0
        %v932 = vadd.f32 0.0, %v931
        %933 = vmatprep.mubr.f32.mxu0 %v303
        %934 = vmatmul.mubr.f32.gmra.mrb[0].mxu0 %v302
        %v935 = vpop.f32.mrb[0].mxu0
        %v936 = vadd.f32 0.0, %v935
        %v937 = vpop.f32.mrb[0].mxu0
        %v938 = vadd.f32 0.0, %v937
        %939 = vmatprep.mubr.f32.mxu0 %v305
        %940 = vmatmul.mubr.f32.gmra.mrb[0].mxu0 %v304
        %v941 = vpop.f32.mrb[0].mxu0
        %v942 = vadd.f32 0.0, %v941
        %v943 = vpop.f32.mrb[0].mxu0
        %v944 = vadd.f32 0.0, %v943
        %945 = vmatprep.mubr.f32.mxu0 %v307
        %946 = vmatmul.mubr.f32.gmra.mrb[0].mxu0 %v306
        %v947 = vpop.f32.mrb[0].mxu0
        %v948 = vadd.f32 0.0, %v947
        %v949 = vpop.f32.mrb[0].mxu0
        %v950 = vadd.f32 0.0, %v949
        %951 = vmatprep.mubr.f32.mxu0 %v309
        %952 = vmatmul.mubr.f32.gmra.mrb[0].mxu0 %v308
        %v953 = vpop.f32.mrb[0].mxu0
        %v954 = vadd.f32 0.0, %v953
        %v955 = vpop.f32.mrb[0].mxu0
        %v956 = vadd.f32 0.0, %v955
        %957 = vmatprep.mubr.f32.mxu0 %v311
        %958 = vmatmul.mubr.f32.gmra.mrb[0].mxu0 %v310
        %v959 = vpop.f32.mrb[0].mxu0
        %v960 = vadd.f32 0.0, %v959
        %v961 = vpop.f32.mrb[0].mxu0
        %v962 = vadd.f32 0.0, %v961
        %963 = vmatprep.mubr.f32.mxu0 %v313
        %964 = vmatmul.mubr.f32.gmra.mrb[0].mxu0 %v312
        %v965 = vpop.f32.mrb[0].mxu0
        %v966 = vadd.f32 0.0, %v965
        %v967 = vpop.f32.mrb[0].mxu0
        %v968 = vadd.f32 0.0, %v967
        %969 = vmatprep.mubr.f32.mxu0 %v315
        %970 = vmatmul.mubr.f32.gmra.mrb[0].mxu0 %v314
        %v971 = vpop.f32.mrb[0].mxu0
        %v972 = vadd.f32 0.0, %v971
        %v973 = vpop.f32.mrb[0].mxu0
        %v974 = vadd.f32 0.0, %v973
        %975 = vmatprep.mubr.f32.mxu0 %v317
        %976 = vmatmul.mubr.f32.gmra.mrb[0].mxu0 %v316
        %v977 = vpop.f32.mrb[0].mxu0
        %v978 = vadd.f32 0.0, %v977
        %v979 = vpop.f32.mrb[0].mxu0
        %v980 = vadd.f32 0.0, %v979
        %981 = vmatprep.mubr.f32.mxu0 %v319
        %982 = vmatmul.mubr.f32.gmra.mrb[0].mxu0 %v318
        %v983 = vpop.f32.mrb[0].mxu0
        %v984 = vadd.f32 0.0, %v983
        %v985 = vpop.f32.mrb[0].mxu0
        %v986 = vadd.f32 0.0, %v985
        %987 = vmatprep.mubr.f32.mxu0 %v321
        %988 = vmatmul.mubr.f32.gmra.mrb[0].mxu0 %v320
        %v989 = vpop.f32.mrb[0].mxu0
        %v990 = vadd.f32 0.0, %v989
        %v991 = vpop.f32.mrb[0].mxu0
        %v992 = vadd.f32 0.0, %v991
        %993 = vmatprep.mubr.f32.mxu0 %v323
        %994 = vmatmul.mubr.f32.gmra.mrb[0].mxu0 %v322
        %v995 = vpop.f32.mrb[0].mxu0
        %v996 = vadd.f32 0.0, %v995
        %v997 = vpop.f32.mrb[0].mxu0
        %v998 = vadd.f32 0.0, %v997
        %999 = vmatprep.mubr.f32.mxu0 %v325
        %1000 = vmatmul.mubr.f32.gmra.mrb[0].mxu0 %v324
        %v1001 = vpop.f32.mrb[0].mxu0
        %v1002 = vadd.f32 0.0, %v1001
        %v1003 = vpop.f32.mrb[0].mxu0
        %v1004 = vadd.f32 0.0, %v1003
        %1005 = vmatprep.mubr.f32.mxu0 %v327
        %1006 = vmatmul.mubr.f32.gmra.mrb[0].mxu0 %v326
        %v1007 = vpop.f32.mrb[0].mxu0
        %v1008 = vadd.f32 0.0, %v1007
        %v1009 = vpop.f32.mrb[0].mxu0
        %v1010 = vadd.f32 0.0, %v1009
        %1011 = vmatprep.mubr.f32.mxu0 %v329
        %1012 = vmatmul.mubr.f32.gmra.mrb[0].mxu0 %v328
        %v1013 = vpop.f32.mrb[0].mxu0
        %v1014 = vadd.f32 0.0, %v1013
        %v1015 = vpop.f32.mrb[0].mxu0
        %v1016 = vadd.f32 0.0, %v1015
        %1017 = vmatprep.mubr.f32.mxu0 %v331
        %1018 = vmatmul.mubr.f32.gmra.mrb[0].mxu0 %v330
        %v1019 = vpop.f32.mrb[0].mxu0
        %v1020 = vadd.f32 0.0, %v1019
        %v1021 = vpop.f32.mrb[0].mxu0
        %v1022 = vadd.f32 0.0, %v1021
        %1023 = vmatprep.mubr.f32.mxu0 %v333
        %1024 = vmatmul.mubr.f32.gmra.mrb[0].mxu0 %v332
        %v1025 = vpop.f32.mrb[0].mxu0
        %v1026 = vadd.f32 0.0, %v1025
        %v1027 = vpop.f32.mrb[0].mxu0
        %v1028 = vadd.f32 0.0, %v1027
        %1029 = vmatprep.mubr.f32.mxu0 %v335
        %1030 = vmatmul.mubr.f32.gmra.mrb[0].mxu0 %v334
        %v1031 = vpop.f32.mrb[0].mxu0
        %v1032 = vadd.f32 0.0, %v1031
        %v1033 = vpop.f32.mrb[0].mxu0
        %v1034 = vadd.f32 0.0, %v1033
        %1035 = vmatprep.mubr.f32.mxu0 %v337
        %1036 = vmatmul.mubr.f32.gmra.mrb[0].mxu0 %v336
        %v1037 = vpop.f32.mrb[0].mxu0
        %v1038 = vadd.f32 0.0, %v1037
        %v1039 = vpop.f32.mrb[0].mxu0
        %v1040 = vadd.f32 0.0, %v1039
        %1041 = vmatprep.mubr.f32.mxu0 %v339
        %1042 = vmatmul.mubr.f32.gmra.mrb[0].mxu0 %v338
        %v1043 = vpop.f32.mrb[0].mxu0
        %v1044 = vadd.f32 0.0, %v1043
        %v1045 = vpop.f32.mrb[0].mxu0
        %v1046 = vadd.f32 0.0, %v1045
        %1047 = vdwg.mxu0
        %1048 = vst [vmem:[%s264] sm:$0xff] %v858
        %1049 = vst [vmem:[%s264 + $0x8] sm:$0xff] %v864
        %1050 = vst [vmem:[%s264 + $0x10] sm:$0xff] %v870
        %1051 = vst [vmem:[%s264 + $0x18] sm:$0xff] %v876
        %1052 = vst [vmem:[%s264 + $0x20] sm:$0xff] %v882
        %1053 = vst [vmem:[%s264 + $0x28] sm:$0xff] %v888
        %1054 = vst [vmem:[%s264 + $0x30] sm:$0xff] %v894
        %1055 = vst [vmem:[%s264 + $0x38] sm:$0xff] %v900
        %1056 = vst [vmem:[%s264 + $0x40] sm:$0xff] %v906
        %1057 = vst [vmem:[%s264 + $0x48] sm:$0xff] %v912
        %1058 = vst [vmem:[%s264 + $0x50] sm:$0xff] %v918
        %1059 = vst [vmem:[%s264 + $0x58] sm:$0xff] %v924
        %1060 = vst [vmem:[%s264 + $0x60] sm:$0xff] %v930
        %1061 = vst [vmem:[%s264 + $0x68] sm:$0xff] %v936
        %1062 = vst [vmem:[%s264 + $0x70] sm:$0xff] %v942
        %1063 = vst [vmem:[%s264 + $0x78] sm:$0xff] %v948
        %1064 = vst [vmem:[%s264 + $0x80] sm:$0xff] %v954
        %1065 = vst [vmem:[%s264 + $0x88] sm:$0xff] %v960
        %1066 = vst [vmem:[%s264 + $0x90] sm:$0xff] %v966
        %1067 = vst [vmem:[%s264 + $0x98] sm:$0xff] %v972
        %1068 = vst [vmem:[%s264 + $0xa0] sm:$0xff] %v978
        %1069 = vst [vmem:[%s264 + $0xa8] sm:$0xff] %v984
        %1070 = vst [vmem:[%s264 + $0xb0] sm:$0xff] %v990
        %1071 = vst [vmem:[%s264 + $0xb8] sm:$0xff] %v996
        %1072 = vst [vmem:[%s264 + $0xc0] sm:$0xff] %v1002
        %1073 = vst [vmem:[%s264 + $0xc8] sm:$0xff] %v1008
        %1074 = vst [vmem:[%s264 + $0xd0] sm:$0xff] %v1014
        %1075 = vst [vmem:[%s264 + $0xd8] sm:$0xff] %v1020
        %1076 = vst [vmem:[%s264 + $0xe0] sm:$0xff] %v1026
        %1077 = vst [vmem:[%s264 + $0xe8] sm:$0xff] %v1032
        %1078 = vst [vmem:[%s264 + $0xf0] sm:$0xff] %v1038
        %1079 = vst [vmem:[%s264 + $0xf8] sm:$0xff] %v1044
        %s1080 = scalar_lea.vmem %s264, 256 [#allocation8]
        %1081 = vst [vmem:[%s1080] sm:$0xff] %v860
        %1082 = vst [vmem:[%s1080 + $0x8] sm:$0xff] %v866
        %1083 = vst [vmem:[%s1080 + $0x10] sm:$0xff] %v872
        %1084 = vst [vmem:[%s1080 + $0x18] sm:$0xff] %v878
        %1085 = vst [vmem:[%s1080 + $0x20] sm:$0xff] %v884
        %1086 = vst [vmem:[%s1080 + $0x28] sm:$0xff] %v890
        %1087 = vst [vmem:[%s1080 + $0x30] sm:$0xff] %v896
        %1088 = vst [vmem:[%s1080 + $0x38] sm:$0xff] %v902
        %1089 = vst [vmem:[%s1080 + $0x40] sm:$0xff] %v908
        %1090 = vst [vmem:[%s1080 + $0x48] sm:$0xff] %v914
        %1091 = vst [vmem:[%s1080 + $0x50] sm:$0xff] %v920
        %1092 = vst [vmem:[%s1080 + $0x58] sm:$0xff] %v926
        %1093 = vst [vmem:[%s1080 + $0x60] sm:$0xff] %v932
        %1094 = vst [vmem:[%s1080 + $0x68] sm:$0xff] %v938
        %1095 = vst [vmem:[%s1080 + $0x70] sm:$0xff] %v944
        %1096 = vst [vmem:[%s1080 + $0x78] sm:$0xff] %v950
        %1097 = vst [vmem:[%s1080 + $0x80] sm:$0xff] %v956
        %1098 = vst [vmem:[%s1080 + $0x88] sm:$0xff] %v962
        %1099 = vst [vmem:[%s1080 + $0x90] sm:$0xff] %v968
        %1100 = vst [vmem:[%s1080 + $0x98] sm:$0xff] %v974
        %1101 = vst [vmem:[%s1080 + $0xa0] sm:$0xff] %v980
        %1102 = vst [vmem:[%s1080 + $0xa8] sm:$0xff] %v986
        %1103 = vst [vmem:[%s1080 + $0xb0] sm:$0xff] %v992
        %1104 = vst [vmem:[%s1080 + $0xb8] sm:$0xff] %v998
        %1105 = vst [vmem:[%s1080 + $0xc0] sm:$0xff] %v1004
        %1106 = vst [vmem:[%s1080 + $0xc8] sm:$0xff] %v1010
        %1107 = vst [vmem:[%s1080 + $0xd0] sm:$0xff] %v1016
        %1108 = vst [vmem:[%s1080 + $0xd8] sm:$0xff] %v1022
        %1109 = vst [vmem:[%s1080 + $0xe0] sm:$0xff] %v1028
        %1110 = vst [vmem:[%s1080 + $0xe8] sm:$0xff] %v1034
        %1111 = vst [vmem:[%s1080 + $0xf0] sm:$0xff] %v1040
        %1112 = vst [vmem:[%s1080 + $0xf8] sm:$0xff] %v1046
        %s1113 = scalar_lea.vmem [#allocation5], 1024
        %v1114 = vld [vmem:[%s1113] sm:$0xff]
        %v1115 = vld [vmem:[%s1113 + $0x8] sm:$0xff]
        %v1116 = vld [vmem:[%s1113 + $0x10] sm:$0xff]
        %v1117 = vld [vmem:[%s1113 + $0x18] sm:$0xff]
        %v1118 = vld [vmem:[%s1113 + $0x20] sm:$0xff]
        %v1119 = vld [vmem:[%s1113 + $0x28] sm:$0xff]
        %v1120 = vld [vmem:[%s1113 + $0x30] sm:$0xff]
        %v1121 = vld [vmem:[%s1113 + $0x38] sm:$0xff]
        %v1122 = vld [vmem:[%s1113 + $0x40] sm:$0xff]
        %v1123 = vld [vmem:[%s1113 + $0x48] sm:$0xff]
        %v1124 = vld [vmem:[%s1113 + $0x50] sm:$0xff]
        %v1125 = vld [vmem:[%s1113 + $0x58] sm:$0xff]
        %v1126 = vld [vmem:[%s1113 + $0x60] sm:$0xff]
        %v1127 = vld [vmem:[%s1113 + $0x68] sm:$0xff]
        %v1128 = vld [vmem:[%s1113 + $0x70] sm:$0xff]
        %v1129 = vld [vmem:[%s1113 + $0x78] sm:$0xff]
        %v1130 = vld [vmem:[%s1113 + $0x80] sm:$0xff]
        %v1131 = vld [vmem:[%s1113 + $0x88] sm:$0xff]
        %v1132 = vld [vmem:[%s1113 + $0x90] sm:$0xff]
        %v1133 = vld [vmem:[%s1113 + $0x98] sm:$0xff]
        %v1134 = vld [vmem:[%s1113 + $0xa0] sm:$0xff]
        %v1135 = vld [vmem:[%s1113 + $0xa8] sm:$0xff]
        %v1136 = vld [vmem:[%s1113 + $0xb0] sm:$0xff]
        %v1137 = vld [vmem:[%s1113 + $0xb8] sm:$0xff]
        %v1138 = vld [vmem:[%s1113 + $0xc0] sm:$0xff]
        %v1139 = vld [vmem:[%s1113 + $0xc8] sm:$0xff]
        %v1140 = vld [vmem:[%s1113 + $0xd0] sm:$0xff]
        %v1141 = vld [vmem:[%s1113 + $0xd8] sm:$0xff]
        %v1142 = vld [vmem:[%s1113 + $0xe0] sm:$0xff]
        %v1143 = vld [vmem:[%s1113 + $0xe8] sm:$0xff]
        %v1144 = vld [vmem:[%s1113 + $0xf0] sm:$0xff]
        %v1145 = vld [vmem:[%s1113 + $0xf8] sm:$0xff]
        %v1146 = vld [vmem:[%s1113 + $0x100] sm:$0xff]
        %v1147 = vld [vmem:[%s1113 + $0x108] sm:$0xff]
        %v1148 = vld [vmem:[%s1113 + $0x110] sm:$0xff]
        %v1149 = vld [vmem:[%s1113 + $0x118] sm:$0xff]
        %v1150 = vld [vmem:[%s1113 + $0x120] sm:$0xff]
        %v1151 = vld [vmem:[%s1113 + $0x128] sm:$0xff]
        %v1152 = vld [vmem:[%s1113 + $0x130] sm:$0xff]
        %v1153 = vld [vmem:[%s1113 + $0x138] sm:$0xff]
        %v1154 = vld [vmem:[%s1113 + $0x140] sm:$0xff]
        %v1155 = vld [vmem:[%s1113 + $0x148] sm:$0xff]
        %v1156 = vld [vmem:[%s1113 + $0x150] sm:$0xff]
        %v1157 = vld [vmem:[%s1113 + $0x158] sm:$0xff]
        %v1158 = vld [vmem:[%s1113 + $0x160] sm:$0xff]
        %v1159 = vld [vmem:[%s1113 + $0x168] sm:$0xff]
        %v1160 = vld [vmem:[%s1113 + $0x170] sm:$0xff]
        %v1161 = vld [vmem:[%s1113 + $0x178] sm:$0xff]
        %v1162 = vld [vmem:[%s1113 + $0x180] sm:$0xff]
        %v1163 = vld [vmem:[%s1113 + $0x188] sm:$0xff]
        %v1164 = vld [vmem:[%s1113 + $0x190] sm:$0xff]
        %v1165 = vld [vmem:[%s1113 + $0x198] sm:$0xff]
        %v1166 = vld [vmem:[%s1113 + $0x1a0] sm:$0xff]
        %v1167 = vld [vmem:[%s1113 + $0x1a8] sm:$0xff]
        %v1168 = vld [vmem:[%s1113 + $0x1b0] sm:$0xff]
        %v1169 = vld [vmem:[%s1113 + $0x1b8] sm:$0xff]
        %v1170 = vld [vmem:[%s1113 + $0x1c0] sm:$0xff]
        %v1171 = vld [vmem:[%s1113 + $0x1c8] sm:$0xff]
        %v1172 = vld [vmem:[%s1113 + $0x1d0] sm:$0xff]
        %v1173 = vld [vmem:[%s1113 + $0x1d8] sm:$0xff]
        %v1174 = vld [vmem:[%s1113 + $0x1e0] sm:$0xff]
        %v1175 = vld [vmem:[%s1113 + $0x1e8] sm:$0xff]
        %v1176 = vld [vmem:[%s1113 + $0x1f0] sm:$0xff]
        %v1177 = vld [vmem:[%s1113 + $0x1f8] sm:$0xff]
        %1178 = vmatprep.subr.mxu0 %v1115
        %1179 = vmatpush1.msra.mxu0 %v1114
        %1180 = vmatprep.subr.mxu0 %v1117
        %1181 = vmatpush1.msra.mxu0 %v1116
        %1182 = vmatprep.subr.mxu0 %v1119
        %1183 = vmatpush1.msra.mxu0 %v1118
        %1184 = vmatprep.subr.mxu0 %v1121
        %1185 = vmatpush1.msra.mxu0 %v1120
        %1186 = vmatprep.subr.mxu0 %v1123
        %1187 = vmatpush1.msra.mxu0 %v1122
        %1188 = vmatprep.subr.mxu0 %v1125
        %1189 = vmatpush1.msra.mxu0 %v1124
        %1190 = vmatprep.subr.mxu0 %v1127
        %1191 = vmatpush1.msra.mxu0 %v1126
        %1192 = vmatprep.subr.mxu0 %v1129
        %1193 = vmatpush1.msra.mxu0 %v1128
        %1194 = vmatprep.subr.mxu0 %v1131
        %1195 = vmatpush1.msra.mxu0 %v1130
        %1196 = vmatprep.subr.mxu0 %v1133
        %1197 = vmatpush1.msra.mxu0 %v1132
        %1198 = vmatprep.subr.mxu0 %v1135
        %1199 = vmatpush1.msra.mxu0 %v1134
        %1200 = vmatprep.subr.mxu0 %v1137
        %1201 = vmatpush1.msra.mxu0 %v1136
        %1202 = vmatprep.subr.mxu0 %v1139
        %1203 = vmatpush1.msra.mxu0 %v1138
        %1204 = vmatprep.subr.mxu0 %v1141
        %1205 = vmatpush1.msra.mxu0 %v1140
        %1206 = vmatprep.subr.mxu0 %v1143
        %1207 = vmatpush1.msra.mxu0 %v1142
        %1208 = vmatprep.subr.mxu0 %v1145
        %1209 = vmatpush1.msra.mxu0 %v1144
        %1210 = vmatprep.subr.mxu0 %v1147
        %1211 = vmatpush1.msra.mxu0 %v1146
        %1212 = vmatprep.subr.mxu0 %v1149
        %1213 = vmatpush1.msra.mxu0 %v1148
        %1214 = vmatprep.subr.mxu0 %v1151
        %1215 = vmatpush1.msra.mxu0 %v1150
        %1216 = vmatprep.subr.mxu0 %v1153
        %1217 = vmatpush1.msra.mxu0 %v1152
        %1218 = vmatprep.subr.mxu0 %v1155
        %1219 = vmatpush1.msra.mxu0 %v1154
        %1220 = vmatprep.subr.mxu0 %v1157
        %1221 = vmatpush1.msra.mxu0 %v1156
        %1222 = vmatprep.subr.mxu0 %v1159
        %1223 = vmatpush1.msra.mxu0 %v1158
        %1224 = vmatprep.subr.mxu0 %v1161
        %1225 = vmatpush1.msra.mxu0 %v1160
        %1226 = vmatprep.subr.mxu0 %v1163
        %1227 = vmatpush1.msra.mxu0 %v1162
        %1228 = vmatprep.subr.mxu0 %v1165
        %1229 = vmatpush1.msra.mxu0 %v1164
        %1230 = vmatprep.subr.mxu0 %v1167
        %1231 = vmatpush1.msra.mxu0 %v1166
        %1232 = vmatprep.subr.mxu0 %v1169
        %1233 = vmatpush1.msra.mxu0 %v1168
        %1234 = vmatprep.subr.mxu0 %v1171
        %1235 = vmatpush1.msra.mxu0 %v1170
        %1236 = vmatprep.subr.mxu0 %v1173
        %1237 = vmatpush1.msra.mxu0 %v1172
        %1238 = vmatprep.subr.mxu0 %v1175
        %1239 = vmatpush1.msra.mxu0 %v1174
        %1240 = vmatprep.subr.mxu0 %v1177
        %1241 = vmatpush1.msra.mxu0 %v1176
        %1242 = vmatprep.mubr.f32.mxu0 %v277
        %1243 = vmatmul.mubr.f32.gmra.mrb[0].mxu0 %v276
        %v1244 = vpop.f32.mrb[0].mxu0
        %v1245 = vadd.f32 0.0, %v1244
        %v1246 = vpop.f32.mrb[0].mxu0
        %v1247 = vadd.f32 0.0, %v1246
        %1248 = vmatprep.mubr.f32.mxu0 %v279
        %1249 = vmatmul.mubr.f32.gmra.mrb[0].mxu0 %v278
        %v1250 = vpop.f32.mrb[0].mxu0
        %v1251 = vadd.f32 0.0, %v1250
        %v1252 = vpop.f32.mrb[0].mxu0
        %v1253 = vadd.f32 0.0, %v1252
        %1254 = vmatprep.mubr.f32.mxu0 %v281
        %1255 = vmatmul.mubr.f32.gmra.mrb[0].mxu0 %v280
        %v1256 = vpop.f32.mrb[0].mxu0
        %v1257 = vadd.f32 0.0, %v1256
        %v1258 = vpop.f32.mrb[0].mxu0
        %v1259 = vadd.f32 0.0, %v1258
        %1260 = vmatprep.mubr.f32.mxu0 %v283
        %1261 = vmatmul.mubr.f32.gmra.mrb[0].mxu0 %v282
        %v1262 = vpop.f32.mrb[0].mxu0
        %v1263 = vadd.f32 0.0, %v1262
        %v1264 = vpop.f32.mrb[0].mxu0
        %v1265 = vadd.f32 0.0, %v1264
        %1266 = vmatprep.mubr.f32.mxu0 %v285
        %1267 = vmatmul.mubr.f32.gmra.mrb[0].mxu0 %v284
        %v1268 = vpop.f32.mrb[0].mxu0
        %v1269 = vadd.f32 0.0, %v1268
        %v1270 = vpop.f32.mrb[0].mxu0
        %v1271 = vadd.f32 0.0, %v1270
        %1272 = vmatprep.mubr.f32.mxu0 %v287
        %1273 = vmatmul.mubr.f32.gmra.mrb[0].mxu0 %v286
        %v1274 = vpop.f32.mrb[0].mxu0
        %v1275 = vadd.f32 0.0, %v1274
        %v1276 = vpop.f32.mrb[0].mxu0
        %v1277 = vadd.f32 0.0, %v1276
        %1278 = vmatprep.mubr.f32.mxu0 %v289
        %1279 = vmatmul.mubr.f32.gmra.mrb[0].mxu0 %v288
        %v1280 = vpop.f32.mrb[0].mxu0
        %v1281 = vadd.f32 0.0, %v1280
        %v1282 = vpop.f32.mrb[0].mxu0
        %v1283 = vadd.f32 0.0, %v1282
        %1284 = vmatprep.mubr.f32.mxu0 %v291
        %1285 = vmatmul.mubr.f32.gmra.mrb[0].mxu0 %v290
        %v1286 = vpop.f32.mrb[0].mxu0
        %v1287 = vadd.f32 0.0, %v1286
        %v1288 = vpop.f32.mrb[0].mxu0
        %v1289 = vadd.f32 0.0, %v1288
        %1290 = vmatprep.mubr.f32.mxu0 %v293
        %1291 = vmatmul.mubr.f32.gmra.mrb[0].mxu0 %v292
        %v1292 = vpop.f32.mrb[0].mxu0
        %v1293 = vadd.f32 0.0, %v1292
        %v1294 = vpop.f32.mrb[0].mxu0
        %v1295 = vadd.f32 0.0, %v1294
        %1296 = vmatprep.mubr.f32.mxu0 %v295
        %1297 = vmatmul.mubr.f32.gmra.mrb[0].mxu0 %v294
        %v1298 = vpop.f32.mrb[0].mxu0
        %v1299 = vadd.f32 0.0, %v1298
        %v1300 = vpop.f32.mrb[0].mxu0
        %v1301 = vadd.f32 0.0, %v1300
        %1302 = vmatprep.mubr.f32.mxu0 %v297
        %1303 = vmatmul.mubr.f32.gmra.mrb[0].mxu0 %v296
        %v1304 = vpop.f32.mrb[0].mxu0
        %v1305 = vadd.f32 0.0, %v1304
        %v1306 = vpop.f32.mrb[0].mxu0
        %v1307 = vadd.f32 0.0, %v1306
        %1308 = vmatprep.mubr.f32.mxu0 %v299
        %1309 = vmatmul.mubr.f32.gmra.mrb[0].mxu0 %v298
        %v1310 = vpop.f32.mrb[0].mxu0
        %v1311 = vadd.f32 0.0, %v1310
        %v1312 = vpop.f32.mrb[0].mxu0
        %v1313 = vadd.f32 0.0, %v1312
        %1314 = vmatprep.mubr.f32.mxu0 %v301
        %1315 = vmatmul.mubr.f32.gmra.mrb[0].mxu0 %v300
        %v1316 = vpop.f32.mrb[0].mxu0
        %v1317 = vadd.f32 0.0, %v1316
        %v1318 = vpop.f32.mrb[0].mxu0
        %v1319 = vadd.f32 0.0, %v1318
        %1320 = vmatprep.mubr.f32.mxu0 %v303
        %1321 = vmatmul.mubr.f32.gmra.mrb[0].mxu0 %v302
        %v1322 = vpop.f32.mrb[0].mxu0
        %v1323 = vadd.f32 0.0, %v1322
        %v1324 = vpop.f32.mrb[0].mxu0
        %v1325 = vadd.f32 0.0, %v1324
        %1326 = vmatprep.mubr.f32.mxu0 %v305
        %1327 = vmatmul.mubr.f32.gmra.mrb[0].mxu0 %v304
        %v1328 = vpop.f32.mrb[0].mxu0
        %v1329 = vadd.f32 0.0, %v1328
        %v1330 = vpop.f32.mrb[0].mxu0
        %v1331 = vadd.f32 0.0, %v1330
        %1332 = vmatprep.mubr.f32.mxu0 %v307
        %1333 = vmatmul.mubr.f32.gmra.mrb[0].mxu0 %v306
        %v1334 = vpop.f32.mrb[0].mxu0
        %v1335 = vadd.f32 0.0, %v1334
        %v1336 = vpop.f32.mrb[0].mxu0
        %v1337 = vadd.f32 0.0, %v1336
        %1338 = vmatprep.mubr.f32.mxu0 %v309
        %1339 = vmatmul.mubr.f32.gmra.mrb[0].mxu0 %v308
        %v1340 = vpop.f32.mrb[0].mxu0
        %v1341 = vadd.f32 0.0, %v1340
        %v1342 = vpop.f32.mrb[0].mxu0
        %v1343 = vadd.f32 0.0, %v1342
        %1344 = vmatprep.mubr.f32.mxu0 %v311
        %1345 = vmatmul.mubr.f32.gmra.mrb[0].mxu0 %v310
        %v1346 = vpop.f32.mrb[0].mxu0
        %v1347 = vadd.f32 0.0, %v1346
        %v1348 = vpop.f32.mrb[0].mxu0
        %v1349 = vadd.f32 0.0, %v1348
        %1350 = vmatprep.mubr.f32.mxu0 %v313
        %1351 = vmatmul.mubr.f32.gmra.mrb[0].mxu0 %v312
        %v1352 = vpop.f32.mrb[0].mxu0
        %v1353 = vadd.f32 0.0, %v1352
        %v1354 = vpop.f32.mrb[0].mxu0
        %v1355 = vadd.f32 0.0, %v1354
        %1356 = vmatprep.mubr.f32.mxu0 %v315
        %1357 = vmatmul.mubr.f32.gmra.mrb[0].mxu0 %v314
        %v1358 = vpop.f32.mrb[0].mxu0
        %v1359 = vadd.f32 0.0, %v1358
        %v1360 = vpop.f32.mrb[0].mxu0
        %v1361 = vadd.f32 0.0, %v1360
        %1362 = vmatprep.mubr.f32.mxu0 %v317
        %1363 = vmatmul.mubr.f32.gmra.mrb[0].mxu0 %v316
        %v1364 = vpop.f32.mrb[0].mxu0
        %v1365 = vadd.f32 0.0, %v1364
        %v1366 = vpop.f32.mrb[0].mxu0
        %v1367 = vadd.f32 0.0, %v1366
        %1368 = vmatprep.mubr.f32.mxu0 %v319
        %1369 = vmatmul.mubr.f32.gmra.mrb[0].mxu0 %v318
        %v1370 = vpop.f32.mrb[0].mxu0
        %v1371 = vadd.f32 0.0, %v1370
        %v1372 = vpop.f32.mrb[0].mxu0
        %v1373 = vadd.f32 0.0, %v1372
        %1374 = vmatprep.mubr.f32.mxu0 %v321
        %1375 = vmatmul.mubr.f32.gmra.mrb[0].mxu0 %v320
        %v1376 = vpop.f32.mrb[0].mxu0
        %v1377 = vadd.f32 0.0, %v1376
        %v1378 = vpop.f32.mrb[0].mxu0
        %v1379 = vadd.f32 0.0, %v1378
        %1380 = vmatprep.mubr.f32.mxu0 %v323
        %1381 = vmatmul.mubr.f32.gmra.mrb[0].mxu0 %v322
        %v1382 = vpop.f32.mrb[0].mxu0
        %v1383 = vadd.f32 0.0, %v1382
        %v1384 = vpop.f32.mrb[0].mxu0
        %v1385 = vadd.f32 0.0, %v1384
        %1386 = vmatprep.mubr.f32.mxu0 %v325
        %1387 = vmatmul.mubr.f32.gmra.mrb[0].mxu0 %v324
        %v1388 = vpop.f32.mrb[0].mxu0
        %v1389 = vadd.f32 0.0, %v1388
        %v1390 = vpop.f32.mrb[0].mxu0
        %v1391 = vadd.f32 0.0, %v1390
        %1392 = vmatprep.mubr.f32.mxu0 %v327
        %1393 = vmatmul.mubr.f32.gmra.mrb[0].mxu0 %v326
        %v1394 = vpop.f32.mrb[0].mxu0
        %v1395 = vadd.f32 0.0, %v1394
        %v1396 = vpop.f32.mrb[0].mxu0
        %v1397 = vadd.f32 0.0, %v1396
        %1398 = vmatprep.mubr.f32.mxu0 %v329
        %1399 = vmatmul.mubr.f32.gmra.mrb[0].mxu0 %v328
        %v1400 = vpop.f32.mrb[0].mxu0
        %v1401 = vadd.f32 0.0, %v1400
        %v1402 = vpop.f32.mrb[0].mxu0
        %v1403 = vadd.f32 0.0, %v1402
        %1404 = vmatprep.mubr.f32.mxu0 %v331
        %1405 = vmatmul.mubr.f32.gmra.mrb[0].mxu0 %v330
        %v1406 = vpop.f32.mrb[0].mxu0
        %v1407 = vadd.f32 0.0, %v1406
        %v1408 = vpop.f32.mrb[0].mxu0
        %v1409 = vadd.f32 0.0, %v1408
        %1410 = vmatprep.mubr.f32.mxu0 %v333
        %1411 = vmatmul.mubr.f32.gmra.mrb[0].mxu0 %v332
        %v1412 = vpop.f32.mrb[0].mxu0
        %v1413 = vadd.f32 0.0, %v1412
        %v1414 = vpop.f32.mrb[0].mxu0
        %v1415 = vadd.f32 0.0, %v1414
        %1416 = vmatprep.mubr.f32.mxu0 %v335
        %1417 = vmatmul.mubr.f32.gmra.mrb[0].mxu0 %v334
        %v1418 = vpop.f32.mrb[0].mxu0
        %v1419 = vadd.f32 0.0, %v1418
        %v1420 = vpop.f32.mrb[0].mxu0
        %v1421 = vadd.f32 0.0, %v1420
        %1422 = vmatprep.mubr.f32.mxu0 %v337
        %1423 = vmatmul.mubr.f32.gmra.mrb[0].mxu0 %v336
        %v1424 = vpop.f32.mrb[0].mxu0
        %v1425 = vadd.f32 0.0, %v1424
        %v1426 = vpop.f32.mrb[0].mxu0
        %v1427 = vadd.f32 0.0, %v1426
        %1428 = vmatprep.mubr.f32.mxu0 %v339
        %1429 = vmatmul.mubr.f32.gmra.mrb[0].mxu0 %v338
        %v1430 = vpop.f32.mrb[0].mxu0
        %v1431 = vadd.f32 0.0, %v1430
        %v1432 = vpop.f32.mrb[0].mxu0
        %v1433 = vadd.f32 0.0, %v1432
        %1434 = vdwg.mxu0
        %1435 = vst [vmem:[%s271] sm:$0xff] %v1245
        %1436 = vst [vmem:[%s271 + $0x8] sm:$0xff] %v1251
        %1437 = vst [vmem:[%s271 + $0x10] sm:$0xff] %v1257
        %1438 = vst [vmem:[%s271 + $0x18] sm:$0xff] %v1263
        %1439 = vst [vmem:[%s271 + $0x20] sm:$0xff] %v1269
        %1440 = vst [vmem:[%s271 + $0x28] sm:$0xff] %v1275
        %1441 = vst [vmem:[%s271 + $0x30] sm:$0xff] %v1281
        %1442 = vst [vmem:[%s271 + $0x38] sm:$0xff] %v1287
        %1443 = vst [vmem:[%s271 + $0x40] sm:$0xff] %v1293
        %1444 = vst [vmem:[%s271 + $0x48] sm:$0xff] %v1299
        %1445 = vst [vmem:[%s271 + $0x50] sm:$0xff] %v1305
        %1446 = vst [vmem:[%s271 + $0x58] sm:$0xff] %v1311
        %1447 = vst [vmem:[%s271 + $0x60] sm:$0xff] %v1317
        %1448 = vst [vmem:[%s271 + $0x68] sm:$0xff] %v1323
        %1449 = vst [vmem:[%s271 + $0x70] sm:$0xff] %v1329
        %1450 = vst [vmem:[%s271 + $0x78] sm:$0xff] %v1335
        %1451 = vst [vmem:[%s271 + $0x80] sm:$0xff] %v1341
        %1452 = vst [vmem:[%s271 + $0x88] sm:$0xff] %v1347
        %1453 = vst [vmem:[%s271 + $0x90] sm:$0xff] %v1353
        %1454 = vst [vmem:[%s271 + $0x98] sm:$0xff] %v1359
        %1455 = vst [vmem:[%s271 + $0xa0] sm:$0xff] %v1365
        %1456 = vst [vmem:[%s271 + $0xa8] sm:$0xff] %v1371
        %1457 = vst [vmem:[%s271 + $0xb0] sm:$0xff] %v1377
        %1458 = vst [vmem:[%s271 + $0xb8] sm:$0xff] %v1383
        %1459 = vst [vmem:[%s271 + $0xc0] sm:$0xff] %v1389
        %1460 = vst [vmem:[%s271 + $0xc8] sm:$0xff] %v1395
        %1461 = vst [vmem:[%s271 + $0xd0] sm:$0xff] %v1401
        %1462 = vst [vmem:[%s271 + $0xd8] sm:$0xff] %v1407
        %1463 = vst [vmem:[%s271 + $0xe0] sm:$0xff] %v1413
        %1464 = vst [vmem:[%s271 + $0xe8] sm:$0xff] %v1419
        %1465 = vst [vmem:[%s271 + $0xf0] sm:$0xff] %v1425
        %1466 = vst [vmem:[%s271 + $0xf8] sm:$0xff] %v1431
        %s1467 = scalar_lea.vmem %s271, 256 [#allocation10]
        %1468 = vst [vmem:[%s1467] sm:$0xff] %v1247
        %1469 = vst [vmem:[%s1467 + $0x8] sm:$0xff] %v1253
        %1470 = vst [vmem:[%s1467 + $0x10] sm:$0xff] %v1259
        %1471 = vst [vmem:[%s1467 + $0x18] sm:$0xff] %v1265
        %1472 = vst [vmem:[%s1467 + $0x20] sm:$0xff] %v1271
        %1473 = vst [vmem:[%s1467 + $0x28] sm:$0xff] %v1277
        %1474 = vst [vmem:[%s1467 + $0x30] sm:$0xff] %v1283
        %1475 = vst [vmem:[%s1467 + $0x38] sm:$0xff] %v1289
        %1476 = vst [vmem:[%s1467 + $0x40] sm:$0xff] %v1295
        %1477 = vst [vmem:[%s1467 + $0x48] sm:$0xff] %v1301
        %1478 = vst [vmem:[%s1467 + $0x50] sm:$0xff] %v1307
        %1479 = vst [vmem:[%s1467 + $0x58] sm:$0xff] %v1313
        %1480 = vst [vmem:[%s1467 + $0x60] sm:$0xff] %v1319
        %1481 = vst [vmem:[%s1467 + $0x68] sm:$0xff] %v1325
        %1482 = vst [vmem:[%s1467 + $0x70] sm:$0xff] %v1331
        %1483 = vst [vmem:[%s1467 + $0x78] sm:$0xff] %v1337
        %1484 = vst [vmem:[%s1467 + $0x80] sm:$0xff] %v1343
        %1485 = vst [vmem:[%s1467 + $0x88] sm:$0xff] %v1349
        %1486 = vst [vmem:[%s1467 + $0x90] sm:$0xff] %v1355
        %1487 = vst [vmem:[%s1467 + $0x98] sm:$0xff] %v1361
        %1488 = vst [vmem:[%s1467 + $0xa0] sm:$0xff] %v1367
        %1489 = vst [vmem:[%s1467 + $0xa8] sm:$0xff] %v1373
        %1490 = vst [vmem:[%s1467 + $0xb0] sm:$0xff] %v1379
        %1491 = vst [vmem:[%s1467 + $0xb8] sm:$0xff] %v1385
        %1492 = vst [vmem:[%s1467 + $0xc0] sm:$0xff] %v1391
        %1493 = vst [vmem:[%s1467 + $0xc8] sm:$0xff] %v1397
        %1494 = vst [vmem:[%s1467 + $0xd0] sm:$0xff] %v1403
        %1495 = vst [vmem:[%s1467 + $0xd8] sm:$0xff] %v1409
        %1496 = vst [vmem:[%s1467 + $0xe0] sm:$0xff] %v1415
        %1497 = vst [vmem:[%s1467 + $0xe8] sm:$0xff] %v1421
        %1498 = vst [vmem:[%s1467 + $0xf0] sm:$0xff] %v1427
        %1499 = vst [vmem:[%s1467 + $0xf8] sm:$0xff] %v1433
        %s1500 = sand.u32 %s97, 1
        %s1501 = scalar_lea.sflag [#allocation4], %s1500
        %s1502 = sand.u32 %s97, 1
        %s1503 = smul.addr %s1502, 512
        %s1504 = scalar_lea.vmem [#allocation7], %s1503
        %s1505 = sand.u32 %s26, 1
        %s1506 = scalar_lea.sflag [#allocation9], %s1505
        %s1507 = sand.u32 %s125, 1
        %s1508 = smul.addr %s1507, 512
        %s1509 = scalar_lea.vmem [#allocation8], %s1508
        %s1510 = sand.u32 %s26, 1
        %s1511 = scalar_lea.sflag [#allocation9], %s1510
        %s1512 = sand.u32 %s153, 1
        %s1513 = smul.addr %s1512, 512
        %s1514 = scalar_lea.vmem [#allocation10], %s1513
        // Predicated region
        $region37: #{tpu_custom_call.1} parent=27 // pred_check
          %p1515 = pneg %p107
        $region38: #{tpu_custom_call.1} parent=27 // pred_check_branch
          %1517 = sbr.rel (%p1515) target = $region40
        $region39: #{tpu_custom_call.1} parent=27 // pred_region
          #allocation12 [shape = 'u32[6]{0}', space=smem, size = 0x18, scoped, tag = 'DMA stride descriptor']
          %s1518 = smul.u32 32, %s31
          %s1520 = ssub.s32 8192, 8192
          %1521 = vsyncadd %s1501, %s1520
          %s1522 = smul.addr %s30, 128
          %s1523 = sadd.s32 %s1518, %s1522
          %s1524 = smul.addr %s1523, 128
          %s1525 = scalar_lea.hbm %s2, %s1524
          %s1527 = sshll.u32 1, 14
          %s1528 = sxor.u32 4294967295, %s1527
          %s1531 = sshll.u32 7, 18
          %s1532 = sxor.u32 4294967295, %s1531
          %s1533 = sand.u32 0, %s1532
          %s1535 = sor.u32 %s1533, 0
          %s1537 = sshll.u32 3, 24
          %s1538 = sxor.u32 4294967295, %s1537
          %s1539 = sand.u32 %s1535, %s1538
          %s1541 = sor.u32 %s1539, 0
          %s1542 = sshll.u32 %s1504, 4
          %s1543 = int_to_ptr.vmem [resolvable:$true] %s1542
          %1549 = sst [smem:[#allocation12]] 4096
          %s1550 = scalar_lea.smem [#allocation12], 1
          %1551 = sst [smem:[%s1550]] 8192
          %s1552 = scalar_lea.smem [#allocation12], 2
          %1553 = sst [smem:[%s1552]] 32
          %s1554 = scalar_lea.smem [#allocation12], 3
          %1555 = sst [smem:[%s1554]] 128
          %s1556 = scalar_lea.smem [#allocation12], 4
          %1557 = sst [smem:[%s1556]] 128
          %s1558 = scalar_lea.smem [#allocation12], 5
          %1559 = sst [smem:[%s1558]] 8
          %1561 = dma.general %s1543, 8192, %s1525, %s1501, [#allocation11], [#allocation12], %s1541, 0
        $region40: #{tpu_custom_call.1} parent=27 // pred_fallthru
          _
        // Predicated region
        $region41: #{tpu_custom_call.1} parent=27 // pred_check
          %p1562 = pneg %p135
        $region42: #{tpu_custom_call.1} parent=27 // pred_check_branch
          %1564 = sbr.rel (%p1562) target = $region44
        $region43: #{tpu_custom_call.1} parent=27 // pred_region
          #allocation14 [shape = 'u32[6]{0}', space=smem, size = 0x18, scoped, tag = 'DMA stride descriptor']
          %s1565 = smul.u32 32, %s31
          %s1567 = ssub.s32 8192, 8192
          %1568 = vsyncadd %s1506, %s1567
          %s1569 = smul.addr %s30, 128
          %s1570 = sadd.s32 %s1565, %s1569
          %s1571 = smul.addr %s1570, 128
          %s1572 = scalar_lea.hbm %s3, %s1571
          %s1574 = sshll.u32 1, 14
          %s1575 = sxor.u32 4294967295, %s1574
          %s1578 = sshll.u32 7, 18
          %s1579 = sxor.u32 4294967295, %s1578
          %s1580 = sand.u32 0, %s1579
          %s1582 = sor.u32 %s1580, 0
          %s1584 = sshll.u32 3, 24
          %s1585 = sxor.u32 4294967295, %s1584
          %s1586 = sand.u32 %s1582, %s1585
          %s1588 = sor.u32 %s1586, 0
          %s1589 = sshll.u32 %s1509, 4
          %s1590 = int_to_ptr.vmem [resolvable:$true] %s1589
          %1596 = sst [smem:[#allocation14]] 4096
          %s1597 = scalar_lea.smem [#allocation14], 1
          %1598 = sst [smem:[%s1597]] 8192
          %s1599 = scalar_lea.smem [#allocation14], 2
          %1600 = sst [smem:[%s1599]] 32
          %s1601 = scalar_lea.smem [#allocation14], 3
          %1602 = sst [smem:[%s1601]] 128
          %s1603 = scalar_lea.smem [#allocation14], 4
          %1604 = sst [smem:[%s1603]] 128
          %s1605 = scalar_lea.smem [#allocation14], 5
          %1606 = sst [smem:[%s1605]] 8
          %1608 = dma.general %s1590, 8192, %s1572, %s1506, [#allocation13], [#allocation14], %s1588, 0
        $region44: #{tpu_custom_call.1} parent=27 // pred_fallthru
          _
        // Predicated region
        $region45: #{tpu_custom_call.1} parent=27 // pred_check
          %p1609 = pneg %p163
        $region46: #{tpu_custom_call.1} parent=27 // pred_check_branch
          %1611 = sbr.rel (%p1609) target = $region48
        $region47: #{tpu_custom_call.1} parent=27 // pred_region
          #allocation16 [shape = 'u32[6]{0}', space=smem, size = 0x18, scoped, tag = 'DMA stride descriptor']
          %s1612 = smul.u32 32, %s31
          %s1614 = ssub.s32 8192, 8192
          %1615 = vsyncadd %s1511, %s1614
          %s1616 = smul.addr %s30, 128
          %s1617 = sadd.s32 %s1612, %s1616
          %s1618 = smul.addr %s1617, 128
          %s1619 = scalar_lea.hbm %s4, %s1618
          %s1621 = sshll.u32 1, 14
          %s1622 = sxor.u32 4294967295, %s1621
          %s1625 = sshll.u32 7, 18
          %s1626 = sxor.u32 4294967295, %s1625
          %s1627 = sand.u32 0, %s1626
          %s1629 = sor.u32 %s1627, 0
          %s1631 = sshll.u32 3, 24
          %s1632 = sxor.u32 4294967295, %s1631
          %s1633 = sand.u32 %s1629, %s1632
          %s1635 = sor.u32 %s1633, 0
          %s1636 = sshll.u32 %s1514, 4
          %s1637 = int_to_ptr.vmem [resolvable:$true] %s1636
          %1643 = sst [smem:[#allocation16]] 4096
          %s1644 = scalar_lea.smem [#allocation16], 1
          %1645 = sst [smem:[%s1644]] 8192
          %s1646 = scalar_lea.smem [#allocation16], 2
          %1647 = sst [smem:[%s1646]] 32
          %s1648 = scalar_lea.smem [#allocation16], 3
          %1649 = sst [smem:[%s1648]] 128
          %s1650 = scalar_lea.smem [#allocation16], 4
          %1651 = sst [smem:[%s1650]] 128
          %s1652 = scalar_lea.smem [#allocation16], 5
          %1653 = sst [smem:[%s1652]] 8
          %1655 = dma.general %s1637, 8192, %s1619, %s1511, [#allocation15], [#allocation16], %s1635, 0
        $region48: #{tpu_custom_call.1} parent=27 // pred_fallthru
          _
      $region28: #{tpu_custom_call.1} parent=5 // pred_fallthru
        _
      %p1656 = scmp.le.s32.totalorder 2, %s21
      // Predicated region
      $region49: #{tpu_custom_call.1} parent=5 // pred_check
        %p1657 = pneg %p1656
      $region50: #{tpu_custom_call.1} parent=5 // pred_check_branch
        %1659 = sbr.rel (%p1657) target = $region52
      $region51: #{tpu_custom_call.1} parent=5 // pred_region
        %s1660 = ssub.s32 %s21, 2
        // Predicated region
        $region53: #{tpu_custom_call.1} parent=51 // pred_check
          %p1661 = pneg %p113
        $region54: #{tpu_custom_call.1} parent=51 // pred_check_branch
          %1663 = sbr.rel (%p1661) target = $region56
        $region55: #{tpu_custom_call.1} parent=51 // pred_region
          %s1664 = sand.u32 %s98, 1
          %s1665 = scalar_lea.sflag [#allocation4], %s1664
          %s1666 = sand.u32 %s98, 1
          %s1667 = smul.addr %s1666, 512
          %s1668 = scalar_lea.vmem [#allocation7], %s1667
          %1669 = dma.done %s1665, 8192
        $region56: #{tpu_custom_call.1} parent=51 // pred_fallthru
          _
        // Predicated region
        $region57: #{tpu_custom_call.1} parent=51 // pred_check
          %p1670 = pneg %p141
        $region58: #{tpu_custom_call.1} parent=51 // pred_check_branch
          %1672 = sbr.rel (%p1670) target = $region60
        $region59: #{tpu_custom_call.1} parent=51 // pred_region
          %s1673 = sand.u32 %s27, 1
          %s1674 = scalar_lea.sflag [#allocation9], %s1673
          %s1675 = sand.u32 %s126, 1
          %s1676 = smul.addr %s1675, 512
          %s1677 = scalar_lea.vmem [#allocation8], %s1676
          %1678 = dma.done %s1674, 8192
        $region60: #{tpu_custom_call.1} parent=51 // pred_fallthru
          _
        // Predicated region
        $region61: #{tpu_custom_call.1} parent=51 // pred_check
          %p1679 = pneg %p169
        $region62: #{tpu_custom_call.1} parent=51 // pred_check_branch
          %1681 = sbr.rel (%p1679) target = $region64
        $region63: #{tpu_custom_call.1} parent=51 // pred_region
          %s1682 = sand.u32 %s27, 1
          %s1683 = scalar_lea.sflag [#allocation9], %s1682
          %s1684 = sand.u32 %s154, 1
          %s1685 = smul.addr %s1684, 512
          %s1686 = scalar_lea.vmem [#allocation10], %s1685
          %1687 = dma.done %s1683, 8192
        $region64: #{tpu_custom_call.1} parent=51 // pred_fallthru
          _
      $region52: #{tpu_custom_call.1} parent=5 // pred_fallthru
        _
    $region6: #{tpu_custom_call.1} parent=1 // loop_footer
      %s25 = sadd.s32 1, %s21
    $region7: #{tpu_custom_call.1} parent=1 // loop_footer_branch
      %20 = sbr.rel target = $region3
    $region8: #{tpu_custom_call.1} parent=1 // loop_exit
      _
    %1688 = vsyncpa [#allocation3], 1
    %s1689 = scalar_lea.sflag [#allocation3], 1
    %1690 = vsyncpa %s1689, 1
    %1691 = vsyncpa [#allocation6], 1
    %1692 = vsyncpa [#allocation4], 1
    %s1693 = scalar_lea.sflag [#allocation4], 1
    %1694 = vsyncpa %s1693, 1
    %1695 = vsyncpa [#allocation9], 1
    %s1696 = scalar_lea.sflag [#allocation9], 1
    %1697 = vsyncpa %s1696, 1

</llo_original>
